<compile_context>
chip_gen: v7x
topology: tpu7x:2x2x1
jax: 0.10.0
libtpu: 0.0.40
codegen_flags: <defaults>
</compile_context>

<pallas_src>
import jax
import jax.numpy as jnp
from jax.experimental import pallas as pl
from jax.experimental.pallas import tpu as pltpu

_LANE = 128
_MAX_BATCH_TILE = 1024  # fits VMEM comfortably even on v7x (64 MiB phys / 32 MiB scoped)


def _round_up(x, m):
    return (x + m - 1) // m * m


def _mlp_kernel(x_ref, w1_ref, w23_ref, b_ref, o_ref):
    # Layer 1: (TM, IN) @ (IN, DP) -> (TM, DP). bf16 MXU operands, f32 accumulate.
    x = x_ref[...].astype(jnp.bfloat16)
    h = jnp.dot(x, w1_ref[...], preferred_element_type=jnp.float32)
    h = jnp.maximum(h + b_ref[0:1, :], 0.0)
    # Layer 2: (TM, DP) @ (DP, DP) -> (TM, DP)
    h = jnp.dot(h.astype(jnp.bfloat16), w23_ref[0], preferred_element_type=jnp.float32)
    h = jnp.maximum(h + b_ref[1:2, :], 0.0)
    # Layer 3 (no activation): (TM, DP) @ (DP, DP) -> (TM, DP), lane-dense store.
    out = jnp.dot(h.astype(jnp.bfloat16), w23_ref[1], preferred_element_type=jnp.float32)
    o_ref[...] = (out + b_ref[2:3, :]).astype(o_ref.dtype)


def prepare_params(params):
    """One-time parameter prep (call once, reuse for every forward).

    PyTorch nn.Linear stores weight as (out_features, in_features); here we
    transpose to (in, out), zero-pad all feature dims (hidden1/hidden2/output)
    to a common 128-multiple DP, cast weights to bf16, and pack:
      w1   : (IN, DP)      bf16
      w23  : (2, DP, DP)   bf16   [w2 at index 0, w3 at index 1]
      bias : (3, DP)       f32    [b1, b2, b3]
    Zero padding keeps the math exact: padded lanes stay 0 through ReLU and
    contribute nothing to the next matmul.
    """
    w1, b1 = params["w1"], params["b1"]
    w2, b2 = params["w2"], params["b2"]
    w3, b3 = params["w3"], params["b3"]

    in_dim = w1.shape[1]
    h1, h2, out_dim = w1.shape[0], w2.shape[0], w3.shape[0]
    dp = _round_up(max(h1, h2, out_dim), _LANE)

    def pad2(a, rows, cols):
        return jnp.pad(a, ((0, rows - a.shape[0]), (0, cols - a.shape[1])))

    w1p = pad2(w1.T, in_dim, dp).astype(jnp.bfloat16)  # (IN, DP)
    w2p = pad2(w2.T, dp, dp).astype(jnp.bfloat16)      # (DP, DP)
    w3p = pad2(w3.T, dp, dp).astype(jnp.bfloat16)      # (DP, DP)
    w23 = jnp.stack([w2p, w3p], axis=0)                # (2, DP, DP)

    bias = jnp.stack([
        jnp.pad(b1, (0, dp - h1)),
        jnp.pad(b2, (0, dp - h2)),
        jnp.pad(b3, (0, dp - out_dim)),
    ], axis=0).astype(jnp.float32)                     # (3, DP)

    return {"w1": w1p, "w23": w23, "bias": bias,
            "in_dim": int(in_dim), "dp": int(dp), "out_dim": int(out_dim),
            "dims": (int(in_dim), int(h1), int(h2), int(out_dim))}


def _pick_batch_tile(b):
    for tm in (1024, 512, 256, 128, 64, 32, 16, 8):
        if tm <= _MAX_BATCH_TILE and b % tm == 0:
            return tm
    return b  # odd/tiny batch: single full-extent block


def feed_forward_nn(x, prep):
    """x: (B, input_dim) float32; prep: output of prepare_params()."""
    b = x.shape[0]
    in_dim, dp, out_dim = prep["in_dim"], prep["dp"], prep["out_dim"]
    tm = _pick_batch_tile(b)
    grid = (b // tm,)

    itemsize = lambda a: a.size * a.dtype.itemsize
    flops = 2 * b * (in_dim * dp + dp * dp + dp * dp)
    bytes_accessed = (itemsize(x) + itemsize(prep["w1"]) + itemsize(prep["w23"])
                      + itemsize(prep["bias"]) + b * dp * 4)

    out_padded = pl.pallas_call(
        _mlp_kernel,
        out_shape=jax.ShapeDtypeStruct((b, dp), jnp.float32),
        grid=grid,
        in_specs=[
            pl.BlockSpec((tm, in_dim), lambda i: (i, 0)),    # batch-tiled activations
            pl.BlockSpec((in_dim, dp), lambda i: (0, 0)),    # VMEM-resident weights
            pl.BlockSpec((2, dp, dp), lambda i: (0, 0, 0)),  # VMEM-resident weights
            pl.BlockSpec((3, dp), lambda i: (0, 0)),         # VMEM-resident biases
        ],
        out_specs=pl.BlockSpec((tm, dp), lambda i: (i, 0)),  # lane-dense output
        compiler_params=pltpu.CompilerParams(
            dimension_semantics=("parallel",)),
        cost_estimate=pl.CostEstimate(
            flops=flops, transcendentals=0, bytes_accessed=bytes_accessed),
    )(x, prep["w1"], prep["w23"], prep["bias"])

    return out_padded[:, :out_dim]


def _ref_forward_f32(x, params):
    """Pure-f32 reference with exact PyTorch semantics."""
    h = x @ params["w1"].T + params["b1"]
    h = jnp.maximum(h, 0.0)
    h = h @ params["w2"].T + params["b2"]
    h = jnp.maximum(h, 0.0)
    return h @ params["w3"].T + params["b3"]


def _ref_forward_prepared(x, prep):
    """Reference matching the kernel's numerics (bf16 operands, f32 accumulate)."""
    xb = x.astype(jnp.bfloat16)
    h = jnp.dot(xb, prep["w1"], preferred_element_type=jnp.float32) + prep["bias"][0:1]
    h = jnp.maximum(h, 0.0)
    h = jnp.dot(h.astype(jnp.bfloat16), prep["w23"][0],
                preferred_element_type=jnp.float32) + prep["bias"][1:2]
    h = jnp.maximum(h, 0.0)
    out = jnp.dot(h.astype(jnp.bfloat16), prep["w23"][1],
                  preferred_element_type=jnp.float32) + prep["bias"][2:3]
    return out[:, :prep["out_dim"]]


def _init_params(key, input_dim, hidden_dim1, hidden_dim2, output_dim):
    """Deterministic init mimicking nn.Linear's default U(-1/sqrt(in), 1/sqrt(in))."""
    ks = jax.random.split(key, 6)

    def lin(kw, kb, in_f, out_f):
        bound = 1.0 / jnp.sqrt(in_f)
        w = jax.random.uniform(kw, (out_f, in_f), jnp.float32, -bound, bound)
        b = jax.random.uniform(kb, (out_f,), jnp.float32, -bound, bound)
        return w, b

    w1, b1 = lin(ks[0], ks[1], input_dim, hidden_dim1)
    w2, b2 = lin(ks[2], ks[3], hidden_dim1, hidden_dim2)
    w3, b3 = lin(ks[4], ks[5], hidden_dim2, output_dim)
    return {"w1": w1, "b1": b1, "w2": w2, "b2": b2, "w3": w3, "b3": b3}


if __name__ == "__main__":
    key = jax.random.PRNGKey(0)
    k_params, k_x = jax.random.split(key)

    # Small MLP dims (SkipGram-style); batch chosen to exercise >1 grid tile.
    batch = 2048
    input_dim, hidden_dim1, hidden_dim2, output_dim = 32, 64, 48, 16

    params = _init_params(k_params, input_dim, hidden_dim1, hidden_dim2, output_dim)
    prep = prepare_params(params)  # one-time layout/packing work
    x = jax.random.normal(k_x, (batch, input_dim), jnp.float32)

    out = feed_forward_nn(x, prep)
    out = jax.block_until_ready(out)
    assert out.shape == (batch, output_dim)

    # Tight check vs a reference using the *same* bf16 packed params (kernel plumbing).
    ref_bf16 = _ref_forward_prepared(x, prep)
    assert jnp.allclose(out, ref_bf16, atol=1e-3, rtol=1e-3), "mismatch vs bf16 reference"

    # Loose check vs full-f32 PyTorch-semantics reference (bf16 operand rounding).
    ref_f32 = _ref_forward_f32(x, params)
    assert jnp.allclose(out, ref_f32, atol=5e-2, rtol=5e-2), "mismatch vs f32 reference"

    print("KERNEL_OK")
</pallas_src>

<mosaic_0001>
module attributes {stable_mosaic.version = 11 : i64} {
  func.func @_mlp_kernel(%arg0: i32, %arg1: memref<1024x32xf32, #tpu.memory_space<vmem>>, %arg2: memref<32x128xbf16, #tpu.memory_space<vmem>>, %arg3: memref<2x128x128xbf16, #tpu.memory_space<vmem>>, %arg4: memref<3x128xf32, #tpu.memory_space<vmem>>, %arg5: memref<1024x128xf32, #tpu.memory_space<vmem>>) attributes {dimension_semantics = [#tpu.dimension_semantics<parallel>], iteration_bounds = array<i64: 2>, scalar_prefetch = 0 : i64, scratch_operands = 0 : i64, tpu.core_type = #tpu.core_type<tc>, window_params = [{transform_indices = @transform_0, window_bounds = array<i64: 1024, 32>}, {pipeline_mode = #tpu.pipeline_mode<synchronous>, transform_indices = @transform_1, window_bounds = array<i64: 32, 128>}, {pipeline_mode = #tpu.pipeline_mode<synchronous>, transform_indices = @transform_2, window_bounds = array<i64: 2, 128, 128>}, {pipeline_mode = #tpu.pipeline_mode<synchronous>, transform_indices = @transform_3, window_bounds = array<i64: 3, 128>}, {transform_indices = @transform_4, window_bounds = array<i64: 1024, 128>}]} {
    %c0 = arith.constant 0 : index
    %c0_0 = arith.constant 0 : index
    %0 = vector.load %arg1[%c0, %c0_0] : memref<1024x32xf32, #tpu.memory_space<vmem>>, vector<1024x32xf32>
    %1 = arith.truncf %0 : vector<1024x32xf32> to vector<1024x32xbf16>
    %c0_1 = arith.constant 0 : index
    %c0_2 = arith.constant 0 : index
    %2 = vector.load %arg2[%c0_1, %c0_2] : memref<32x128xbf16, #tpu.memory_space<vmem>>, vector<32x128xbf16>
    %cst = arith.constant dense<0.000000e+00> : vector<1024x128xf32>
    %3 = tpu.matmul %1, %2, %cst {dimension_numbers = #tpu.dot_dimension_numbers<[1], [0], [0], [1], [0, 0, 1, 1], [], []>} : vector<1024x32xbf16>, vector<32x128xbf16>, vector<1024x128xf32> -> vector<1024x128xf32>
    %c0_3 = arith.constant 0 : index
    %c0_4 = arith.constant 0 : index
    %4 = vector.load %arg4[%c0_3, %c0_4] : memref<3x128xf32, #tpu.memory_space<vmem>>, vector<1x128xf32>
    %5 = vector.broadcast %4 : vector<1x128xf32> to vector<1024x128xf32>
    %6 = arith.addf %3, %5 : vector<1024x128xf32>
    %cst_5 = arith.constant 0.000000e+00 : f32
    %7 = vector.broadcast %cst_5 : f32 to vector<1024x128xf32>
    %8 = arith.maximumf %6, %7 : vector<1024x128xf32>
    %9 = arith.truncf %8 : vector<1024x128xf32> to vector<1024x128xbf16>
    %c0_6 = arith.constant 0 : index
    %c0_7 = arith.constant 0 : index
    %c0_8 = arith.constant 0 : index
    %10 = vector.load %arg3[%c0_6, %c0_7, %c0_8] : memref<2x128x128xbf16, #tpu.memory_space<vmem>>, vector<1x128x128xbf16>
    %11 = vector.shape_cast %10 : vector<1x128x128xbf16> to vector<128x128xbf16>
    %cst_9 = arith.constant dense<0.000000e+00> : vector<1024x128xf32>
    %12 = tpu.matmul %9, %11, %cst_9 {dimension_numbers = #tpu.dot_dimension_numbers<[1], [0], [0], [1], [0, 0, 1, 1], [], []>} : vector<1024x128xbf16>, vector<128x128xbf16>, vector<1024x128xf32> -> vector<1024x128xf32>
    %c1 = arith.constant 1 : index
    %c0_10 = arith.constant 0 : index
    %13 = vector.load %arg4[%c1, %c0_10] : memref<3x128xf32, #tpu.memory_space<vmem>>, vector<1x128xf32>
    %14 = vector.broadcast %13 : vector<1x128xf32> to vector<1024x128xf32>
    %15 = arith.addf %12, %14 : vector<1024x128xf32>
    %cst_11 = arith.constant 0.000000e+00 : f32
    %16 = vector.broadcast %cst_11 : f32 to vector<1024x128xf32>
    %17 = arith.maximumf %15, %16 : vector<1024x128xf32>
    %18 = arith.truncf %17 : vector<1024x128xf32> to vector<1024x128xbf16>
    %c1_12 = arith.constant 1 : index
    %c0_13 = arith.constant 0 : index
    %c0_14 = arith.constant 0 : index
    %19 = vector.load %arg3[%c1_12, %c0_13, %c0_14] : memref<2x128x128xbf16, #tpu.memory_space<vmem>>, vector<1x128x128xbf16>
    %20 = vector.shape_cast %19 : vector<1x128x128xbf16> to vector<128x128xbf16>
    %cst_15 = arith.constant dense<0.000000e+00> : vector<1024x128xf32>
    %21 = tpu.matmul %18, %20, %cst_15 {dimension_numbers = #tpu.dot_dimension_numbers<[1], [0], [0], [1], [0, 0, 1, 1], [], []>} : vector<1024x128xbf16>, vector<128x128xbf16>, vector<1024x128xf32> -> vector<1024x128xf32>
    %c2 = arith.constant 2 : index
    %c0_16 = arith.constant 0 : index
    %22 = vector.load %arg4[%c2, %c0_16] : memref<3x128xf32, #tpu.memory_space<vmem>>, vector<1x128xf32>
    %23 = vector.broadcast %22 : vector<1x128xf32> to vector<1024x128xf32>
    %24 = arith.addf %21, %23 : vector<1024x128xf32>
    %c0_17 = arith.constant 0 : index
    %c0_18 = arith.constant 0 : index
    %25 = vector.load %arg5[%c0_17, %c0_18] : memref<1024x128xf32, #tpu.memory_space<vmem>>, vector<1024x128xf32>
    tpu.vector_store %arg5[%c0_17, %c0_18], %24 {strides = array<i32>} : memref<1024x128xf32, #tpu.memory_space<vmem>>, vector<1024x128xf32>,
    return
  }
  func.func @transform_0(%arg0: i32) -> (i32, i32) {
    %c0_i32 = arith.constant 0 : i32
    %c0_i32_0 = arith.constant 0 : i32
    return %arg0, %c0_i32 : i32, i32
  }
  func.func @transform_1(%arg0: i32) -> (i32, i32) {
    %c0_i32 = arith.constant 0 : i32
    %c0_i32_0 = arith.constant 0 : i32
    %c0_i32_1 = arith.constant 0 : i32
    return %c0_i32, %c0_i32_0 : i32, i32
  }
  func.func @transform_2(%arg0: i32) -> (i32, i32, i32) {
    %c0_i32 = arith.constant 0 : i32
    %c0_i32_0 = arith.constant 0 : i32
    %c0_i32_1 = arith.constant 0 : i32
    %c0_i32_2 = arith.constant 0 : i32
    return %c0_i32, %c0_i32_0, %c0_i32_1 : i32, i32, i32
  }
  func.func @transform_3(%arg0: i32) -> (i32, i32) {
    %c0_i32 = arith.constant 0 : i32
    %c0_i32_0 = arith.constant 0 : i32
    %c0_i32_1 = arith.constant 0 : i32
    return %c0_i32, %c0_i32_0 : i32, i32
  }
  func.func @transform_4(%arg0: i32) -> (i32, i32) {
    %c0_i32 = arith.constant 0 : i32
    %c0_i32_0 = arith.constant 0 : i32
    return %arg0, %c0_i32 : i32, i32
  }
}

</mosaic_0001>

<llo_original>
// kernel: tpu_custom_call.1
$region0: #{tpu_custom_call.1}
  #allocation0 [shape = 'u32[]', space=smem, size = 0x4, offset = 0x4, fixed_abs, tag = 'smem constant byte address 0x4 - core index']
  #allocation1 [shape = 'u32[144,128]{1,0:T(1,128)}', space=vmem, size = 0x12000, scoped, tag = 'internal scratch']
  %s0 = inlined_call_operand.vmem [shape: f32[2048,32], index: 0, kind: input, shape index: {}]
  %s1 = inlined_call_operand.vmem [shape: bf16[32,128], index: 1, kind: input, shape index: {}]
  %s2 = inlined_call_operand.vmem [shape: bf16[2,128,128], index: 2, kind: input, shape index: {}]
  %s3 = inlined_call_operand.vmem [shape: f32[3,128], index: 3, kind: input, shape index: {}]
  %s4 = inlined_call_operand.hbm [shape: f32[2048,128], index: 4, kind: output, shape index: {}]
  %s5 = sld [smem:[#allocation0]]
  $region49: #{tpu_custom_call.1} parent=0
    _
  %s7 = ssub.s32 1, %s5
  %s8 = scalar_select 0, %s7, %s5
  $region1: #{tpu_custom_call.1} parent=0
    #allocation2 [shape = 'u8[1048576]{0}', space=vmem, size = 0x100000, scoped, tag = 'output window, operand 0']
    #allocation3 [shape = 's32[2]{0}', space=sflag, size = 0x8, scoped, tag = 'scoped memory for tpu_custom_call.1']
    %9 = vsyncpa [#allocation3], 0
    %s10 = scalar_lea.sflag [#allocation3], 1
    %11 = vsyncpa %s10, 0
    loop: start=0, step=1, limit=4
    $region2: #{tpu_custom_call.1} parent=1 // loop_pre_header
      _
    $region3: #{tpu_custom_call.1} parent=1 // loop_header
      %s13 = sphi 0, %s17
      %p14 = scmp.ge.s32.totalorder %s13, 4
      %s23 = sphi 0, %s25
      %s26 = sphi 0, %s23
      %s27 = sphi 0, %s26
      %s43 = sphi 0, %s27
      %s47 = sphi 0, %s47
      %s49 = sphi 0, %s47
      %s50 = sphi 0, %s49
      %s64 = sphi 0, %s50
      %s68 = sphi 0, %s68
      %s70 = sphi 0, %s68
      %s71 = sphi 0, %s70
      %s85 = sphi 0, %s71
      %s89 = sphi 0, %s89
      %s91 = sphi 0, %s89
      %s92 = sphi 0, %s91
      %s106 = sphi 0, %s92
      %s112 = sphi 0, %s114
      %s115 = sphi 0, %s112
      %s116 = sphi 0, %s115
      %s132 = sphi 0, %s116
    $region4: #{tpu_custom_call.1} parent=1 // loop_header_branch
      %16 = sbr.rel (%p14) target = $region8
    $region5: #{tpu_custom_call.1} parent=1 // loop_body
      %s18 = ssub.s32 %s13, 1
      %s19 = ssub.s32 %s13, 2
      %s20 = sadd.s32 %s13, 1
      %s21 = ssub.s32 %s13, %s20
      %p22 = scmp.eq.s32.totalorder %s21, 0
      %s24 = sadd.s32 %s23, 1
      %s25 = scalar_select %p22, %s23, %s24
      %p28 = pneg %p22
      %p29 = scmp.eq.s32.totalorder %s13, 1
      %p30 = por %p28, %p29
      %p31 = scmp.ne.s32.totalorder %s23, %s26
      %p32 = scmp.eq.s32.totalorder %s13, 0
      %p33 = por %p31, %p32
      %p34 = scmp.ne.s32.totalorder %s23, %s26
      %p35 = scmp.eq.s32.totalorder %s18, 1
      %p36 = por %p34, %p35
      %p37 = scmp.ne.s32.totalorder %s26, %s27
      %p38 = scmp.eq.s32.totalorder %s18, 0
      %p39 = por %p37, %p38
      %p40 = scmp.ne.s32.totalorder %s26, %s27
      %p41 = scmp.eq.s32.totalorder %s19, 1
      %p42 = por %p40, %p41
      %p44 = scmp.ne.s32.totalorder %s27, %s43
      %p45 = scmp.eq.s32.totalorder %s19, 0
      %p46 = por %p44, %p45
      %s48 = sadd.s32 %s47, 1
      %p51 = scmp.eq.s32.totalorder %s13, 1
      %p52 = scmp.ne.s32.totalorder %s47, %s49
      %p53 = scmp.eq.s32.totalorder %s13, 0
      %p54 = por %p52, %p53
      %p55 = scmp.ne.s32.totalorder %s47, %s49
      %p56 = scmp.eq.s32.totalorder %s18, 1
      %p57 = por %p55, %p56
      %p58 = scmp.ne.s32.totalorder %s49, %s50
      %p59 = scmp.eq.s32.totalorder %s18, 0
      %p60 = por %p58, %p59
      %p61 = scmp.ne.s32.totalorder %s49, %s50
      %p62 = scmp.eq.s32.totalorder %s19, 1
      %p63 = por %p61, %p62
      %p65 = scmp.ne.s32.totalorder %s50, %s64
      %p66 = scmp.eq.s32.totalorder %s19, 0
      %p67 = por %p65, %p66
      %s69 = sadd.s32 %s68, 1
      %p72 = scmp.eq.s32.totalorder %s13, 1
      %p73 = scmp.ne.s32.totalorder %s68, %s70
      %p74 = scmp.eq.s32.totalorder %s13, 0
      %p75 = por %p73, %p74
      %p76 = scmp.ne.s32.totalorder %s68, %s70
      %p77 = scmp.eq.s32.totalorder %s18, 1
      %p78 = por %p76, %p77
      %p79 = scmp.ne.s32.totalorder %s70, %s71
      %p80 = scmp.eq.s32.totalorder %s18, 0
      %p81 = por %p79, %p80
      %p82 = scmp.ne.s32.totalorder %s70, %s71
      %p83 = scmp.eq.s32.totalorder %s19, 1
      %p84 = por %p82, %p83
      %p86 = scmp.ne.s32.totalorder %s71, %s85
      %p87 = scmp.eq.s32.totalorder %s19, 0
      %p88 = por %p86, %p87
      %s90 = sadd.s32 %s89, 1
      %p93 = scmp.eq.s32.totalorder %s13, 1
      %p94 = scmp.ne.s32.totalorder %s89, %s91
      %p95 = scmp.eq.s32.totalorder %s13, 0
      %p96 = por %p94, %p95
      %p97 = scmp.ne.s32.totalorder %s89, %s91
      %p98 = scmp.eq.s32.totalorder %s18, 1
      %p99 = por %p97, %p98
      %p100 = scmp.ne.s32.totalorder %s91, %s92
      %p101 = scmp.eq.s32.totalorder %s18, 0
      %p102 = por %p100, %p101
      %p103 = scmp.ne.s32.totalorder %s91, %s92
      %p104 = scmp.eq.s32.totalorder %s19, 1
      %p105 = por %p103, %p104
      %p107 = scmp.ne.s32.totalorder %s92, %s106
      %p108 = scmp.eq.s32.totalorder %s19, 0
      %p109 = por %p107, %p108
      %s110 = ssub.s32 %s13, %s20
      %p111 = scmp.eq.s32.totalorder %s110, 0
      %s113 = sadd.s32 %s112, 1
      %s114 = scalar_select %p111, %s112, %s113
      %p117 = pneg %p111
      %p118 = scmp.eq.s32.totalorder %s13, 1
      %p119 = por %p117, %p118
      %p120 = scmp.ne.s32.totalorder %s112, %s115
      %p121 = scmp.eq.s32.totalorder %s13, 0
      %p122 = por %p120, %p121
      %p123 = scmp.ne.s32.totalorder %s112, %s115
      %p124 = scmp.eq.s32.totalorder %s18, 1
      %p125 = por %p123, %p124
      %p126 = scmp.ne.s32.totalorder %s115, %s116
      %p127 = scmp.eq.s32.totalorder %s18, 0
      %p128 = por %p126, %p127
      %p129 = scmp.ne.s32.totalorder %s115, %s116
      %p130 = scmp.eq.s32.totalorder %s19, 1
      %p131 = por %p129, %p130
      %p133 = scmp.ne.s32.totalorder %s116, %s132
      %p134 = scmp.eq.s32.totalorder %s19, 0
      %p135 = por %p133, %p134
      %p136 = scmp.le.s32.totalorder 1, %s13
      %p137 = scmp.lt.s32.totalorder %s13, 3
      %p138 = pnand %p136, %p137
      %p139 = pneg %p138
      // Predicated region
      $region9: #{tpu_custom_call.1} parent=5 // pred_check
        _
      $region10: #{tpu_custom_call.1} parent=5 // pred_check_branch
        %141 = sbr.rel (%p138) target = $region12
      $region11: #{tpu_custom_call.1} parent=5 // pred_region
        %s142 = ssub.s32 %s13, 1
        // Predicated region
        $region13: #{tpu_custom_call.1} parent=11 // pred_check
          %p143 = pneg %p60
        $region14: #{tpu_custom_call.1} parent=11 // pred_check_branch
          %145 = sbr.rel (%p143) target = $region16
        $region15: #{tpu_custom_call.1} parent=11 // pred_region
          _
        $region16: #{tpu_custom_call.1} parent=11 // pred_fallthru
          _
        // Predicated region
        $region17: #{tpu_custom_call.1} parent=11 // pred_check
          %p146 = pneg %p81
        $region18: #{tpu_custom_call.1} parent=11 // pred_check_branch
          %148 = sbr.rel (%p146) target = $region20
        $region19: #{tpu_custom_call.1} parent=11 // pred_region
          _
        $region20: #{tpu_custom_call.1} parent=11 // pred_fallthru
          _
        // Predicated region
        $region21: #{tpu_custom_call.1} parent=11 // pred_check
          %p149 = pneg %p102
        $region22: #{tpu_custom_call.1} parent=11 // pred_check_branch
          %151 = sbr.rel (%p149) target = $region24
        $region23: #{tpu_custom_call.1} parent=11 // pred_region
          _
        $region24: #{tpu_custom_call.1} parent=11 // pred_fallthru
          _
      $region12: #{tpu_custom_call.1} parent=5 // pred_fallthru
        _
      %p152 = scmp.lt.s32.totalorder %s13, 2
      // Predicated region
      $region25: #{tpu_custom_call.1} parent=5 // pred_check
        %p153 = pneg %p152
      $region26: #{tpu_custom_call.1} parent=5 // pred_check_branch
        %155 = sbr.rel (%p153) target = $region28
      $region27: #{tpu_custom_call.1} parent=5 // pred_region
        // Predicated region
        $region29: #{tpu_custom_call.1} parent=27 // pred_check
          %p156 = pneg %p33
        $region30: #{tpu_custom_call.1} parent=27 // pred_check_branch
          %158 = sbr.rel (%p156) target = $region32
        $region31: #{tpu_custom_call.1} parent=27 // pred_region
          %s159 = smul.u32 128, %s13
          %p160 = scmp.lt.s32.totalorder %s159, 255
          %s161 = scalar_select %p160, %s159, 255
          %s162 = smul.addr %s161, 8
          %s163 = scalar_lea.vmem %s0, %s162
          %s164 = smul.u32 128, %s13
        $region32: #{tpu_custom_call.1} parent=27 // pred_fallthru
          _
      $region28: #{tpu_custom_call.1} parent=5 // pred_fallthru
        _
      %p165 = scmp.le.s32.totalorder 1, %s13
      %p166 = scmp.lt.s32.totalorder %s13, 3
      %p167 = pnand %p165, %p166
      %p168 = pneg %p167
      // Predicated region
      $region33: #{tpu_custom_call.1} parent=5 // pred_check
        _
      $region34: #{tpu_custom_call.1} parent=5 // pred_check_branch
        %170 = sbr.rel (%p167) target = $region36
      $region35: #{tpu_custom_call.1} parent=5 // pred_region
        %s171 = ssub.s32 %s13, 1
        %s172 = smul.u32 128, %s18
        %p173 = scmp.lt.s32.totalorder %s172, 255
        %s174 = scalar_select %p173, %s172, 255
        %s175 = smul.addr %s174, 8
        %s176 = scalar_lea.vmem %s0, %s175
        %p177 = pneg %p39
        %p178 = pneg %p36
        %p179 = pneg %p60
        %p180 = pneg %p57
        %p181 = pneg %p81
        %p182 = pneg %p78
        %p183 = pneg %p102
        %p184 = pneg %p99
        %p185 = pneg %p128
        %p186 = pneg %p125
        %s187 = sand.u32 %s115, 1
        %s188 = scalar_lea.sflag [#allocation3], %s187
        %s189 = sand.u32 %s115, 1
        %s190 = smul.addr %s189, 1024
        %s191 = scalar_lea.vmem [#allocation2], %s190
        %s192 = smul.u32 128, %s18
        %p193 = scmp.lt.s32.totalorder %s192, 255
        %s194 = scalar_select %p193, %s192, 255
        %s195 = smul.addr %s194, 8
        %s196 = scalar_lea.vmem %s0, %s195
        %s197 = smul.u32 128, %s18
        %s198 = smul.u32 128, %s18
        %v200 = vld [vmem:[%s196] sm:$0xff]
        %v201 = vld [vmem:[%s196 + $0x8] sm:$0xff]
        %v202 = vld [vmem:[%s196 + $0x10] sm:$0xff]
        %v203 = vld [vmem:[%s196 + $0x18] sm:$0xff]
        %v204 = vld [vmem:[%s196 + $0x20] sm:$0xff]
        %v205 = vld [vmem:[%s196 + $0x28] sm:$0xff]
        %v206 = vld [vmem:[%s196 + $0x30] sm:$0xff]
        %v207 = vld [vmem:[%s196 + $0x38] sm:$0xff]
        %v208 = vld [vmem:[%s196 + $0x40] sm:$0xff]
        %v209 = vld [vmem:[%s196 + $0x48] sm:$0xff]
        %v210 = vld [vmem:[%s196 + $0x50] sm:$0xff]
        %v211 = vld [vmem:[%s196 + $0x58] sm:$0xff]
        %v212 = vld [vmem:[%s196 + $0x60] sm:$0xff]
        %v213 = vld [vmem:[%s196 + $0x68] sm:$0xff]
        %v214 = vld [vmem:[%s196 + $0x70] sm:$0xff]
        %v215 = vld [vmem:[%s196 + $0x78] sm:$0xff]
        %v216 = vld [vmem:[%s196 + $0x80] sm:$0xff]
        %v217 = vld [vmem:[%s196 + $0x88] sm:$0xff]
        %v218 = vld [vmem:[%s196 + $0x90] sm:$0xff]
        %v219 = vld [vmem:[%s196 + $0x98] sm:$0xff]
        %v220 = vld [vmem:[%s196 + $0xa0] sm:$0xff]
        %v221 = vld [vmem:[%s196 + $0xa8] sm:$0xff]
        %v222 = vld [vmem:[%s196 + $0xb0] sm:$0xff]
        %v223 = vld [vmem:[%s196 + $0xb8] sm:$0xff]
        %v224 = vld [vmem:[%s196 + $0xc0] sm:$0xff]
        %v225 = vld [vmem:[%s196 + $0xc8] sm:$0xff]
        %v226 = vld [vmem:[%s196 + $0xd0] sm:$0xff]
        %v227 = vld [vmem:[%s196 + $0xd8] sm:$0xff]
        %v228 = vld [vmem:[%s196 + $0xe0] sm:$0xff]
        %v229 = vld [vmem:[%s196 + $0xe8] sm:$0xff]
        %v230 = vld [vmem:[%s196 + $0xf0] sm:$0xff]
        %v231 = vld [vmem:[%s196 + $0xf8] sm:$0xff]
        %v232 = vld [vmem:[%s196 + $0x100] sm:$0xff]
        %v233 = vld [vmem:[%s196 + $0x108] sm:$0xff]
        %v234 = vld [vmem:[%s196 + $0x110] sm:$0xff]
        %v235 = vld [vmem:[%s196 + $0x118] sm:$0xff]
        %v236 = vld [vmem:[%s196 + $0x120] sm:$0xff]
        %v237 = vld [vmem:[%s196 + $0x128] sm:$0xff]
        %v238 = vld [vmem:[%s196 + $0x130] sm:$0xff]
        %v239 = vld [vmem:[%s196 + $0x138] sm:$0xff]
        %v240 = vld [vmem:[%s196 + $0x140] sm:$0xff]
        %v241 = vld [vmem:[%s196 + $0x148] sm:$0xff]
        %v242 = vld [vmem:[%s196 + $0x150] sm:$0xff]
        %v243 = vld [vmem:[%s196 + $0x158] sm:$0xff]
        %v244 = vld [vmem:[%s196 + $0x160] sm:$0xff]
        %v245 = vld [vmem:[%s196 + $0x168] sm:$0xff]
        %v246 = vld [vmem:[%s196 + $0x170] sm:$0xff]
        %v247 = vld [vmem:[%s196 + $0x178] sm:$0xff]
        %v248 = vld [vmem:[%s196 + $0x180] sm:$0xff]
        %v249 = vld [vmem:[%s196 + $0x188] sm:$0xff]
        %v250 = vld [vmem:[%s196 + $0x190] sm:$0xff]
        %v251 = vld [vmem:[%s196 + $0x198] sm:$0xff]
        %v252 = vld [vmem:[%s196 + $0x1a0] sm:$0xff]
        %v253 = vld [vmem:[%s196 + $0x1a8] sm:$0xff]
        %v254 = vld [vmem:[%s196 + $0x1b0] sm:$0xff]
        %v255 = vld [vmem:[%s196 + $0x1b8] sm:$0xff]
        %v256 = vld [vmem:[%s196 + $0x1c0] sm:$0xff]
        %v257 = vld [vmem:[%s196 + $0x1c8] sm:$0xff]
        %v258 = vld [vmem:[%s196 + $0x1d0] sm:$0xff]
        %v259 = vld [vmem:[%s196 + $0x1d8] sm:$0xff]
        %v260 = vld [vmem:[%s196 + $0x1e0] sm:$0xff]
        %v261 = vld [vmem:[%s196 + $0x1e8] sm:$0xff]
        %v262 = vld [vmem:[%s196 + $0x1f0] sm:$0xff]
        %v263 = vld [vmem:[%s196 + $0x1f8] sm:$0xff]
        %v264 = vld [vmem:[%s196 + $0x200] sm:$0xff]
        %v265 = vld [vmem:[%s196 + $0x208] sm:$0xff]
        %v266 = vld [vmem:[%s196 + $0x210] sm:$0xff]
        %v267 = vld [vmem:[%s196 + $0x218] sm:$0xff]
        %v268 = vld [vmem:[%s196 + $0x220] sm:$0xff]
        %v269 = vld [vmem:[%s196 + $0x228] sm:$0xff]
        %v270 = vld [vmem:[%s196 + $0x230] sm:$0xff]
        %v271 = vld [vmem:[%s196 + $0x238] sm:$0xff]
        %v272 = vld [vmem:[%s196 + $0x240] sm:$0xff]
        %v273 = vld [vmem:[%s196 + $0x248] sm:$0xff]
        %v274 = vld [vmem:[%s196 + $0x250] sm:$0xff]
        %v275 = vld [vmem:[%s196 + $0x258] sm:$0xff]
        %v276 = vld [vmem:[%s196 + $0x260] sm:$0xff]
        %v277 = vld [vmem:[%s196 + $0x268] sm:$0xff]
        %v278 = vld [vmem:[%s196 + $0x270] sm:$0xff]
        %v279 = vld [vmem:[%s196 + $0x278] sm:$0xff]
        %v280 = vld [vmem:[%s196 + $0x280] sm:$0xff]
        %v281 = vld [vmem:[%s196 + $0x288] sm:$0xff]
        %v282 = vld [vmem:[%s196 + $0x290] sm:$0xff]
        %v283 = vld [vmem:[%s196 + $0x298] sm:$0xff]
        %v284 = vld [vmem:[%s196 + $0x2a0] sm:$0xff]
        %v285 = vld [vmem:[%s196 + $0x2a8] sm:$0xff]
        %v286 = vld [vmem:[%s196 + $0x2b0] sm:$0xff]
        %v287 = vld [vmem:[%s196 + $0x2b8] sm:$0xff]
        %v288 = vld [vmem:[%s196 + $0x2c0] sm:$0xff]
        %v289 = vld [vmem:[%s196 + $0x2c8] sm:$0xff]
        %v290 = vld [vmem:[%s196 + $0x2d0] sm:$0xff]
        %v291 = vld [vmem:[%s196 + $0x2d8] sm:$0xff]
        %v292 = vld [vmem:[%s196 + $0x2e0] sm:$0xff]
        %v293 = vld [vmem:[%s196 + $0x2e8] sm:$0xff]
        %v294 = vld [vmem:[%s196 + $0x2f0] sm:$0xff]
        %v295 = vld [vmem:[%s196 + $0x2f8] sm:$0xff]
        %v296 = vld [vmem:[%s196 + $0x300] sm:$0xff]
        %v297 = vld [vmem:[%s196 + $0x308] sm:$0xff]
        %v298 = vld [vmem:[%s196 + $0x310] sm:$0xff]
        %v299 = vld [vmem:[%s196 + $0x318] sm:$0xff]
        %v300 = vld [vmem:[%s196 + $0x320] sm:$0xff]
        %v301 = vld [vmem:[%s196 + $0x328] sm:$0xff]
        %v302 = vld [vmem:[%s196 + $0x330] sm:$0xff]
        %v303 = vld [vmem:[%s196 + $0x338] sm:$0xff]
        %v304 = vld [vmem:[%s196 + $0x340] sm:$0xff]
        %v305 = vld [vmem:[%s196 + $0x348] sm:$0xff]
        %v306 = vld [vmem:[%s196 + $0x350] sm:$0xff]
        %v307 = vld [vmem:[%s196 + $0x358] sm:$0xff]
        %v308 = vld [vmem:[%s196 + $0x360] sm:$0xff]
        %v309 = vld [vmem:[%s196 + $0x368] sm:$0xff]
        %v310 = vld [vmem:[%s196 + $0x370] sm:$0xff]
        %v311 = vld [vmem:[%s196 + $0x378] sm:$0xff]
        %v312 = vld [vmem:[%s196 + $0x380] sm:$0xff]
        %v313 = vld [vmem:[%s196 + $0x388] sm:$0xff]
        %v314 = vld [vmem:[%s196 + $0x390] sm:$0xff]
        %v315 = vld [vmem:[%s196 + $0x398] sm:$0xff]
        %v316 = vld [vmem:[%s196 + $0x3a0] sm:$0xff]
        %v317 = vld [vmem:[%s196 + $0x3a8] sm:$0xff]
        %v318 = vld [vmem:[%s196 + $0x3b0] sm:$0xff]
        %v319 = vld [vmem:[%s196 + $0x3b8] sm:$0xff]
        %v320 = vld [vmem:[%s196 + $0x3c0] sm:$0xff]
        %v321 = vld [vmem:[%s196 + $0x3c8] sm:$0xff]
        %v322 = vld [vmem:[%s196 + $0x3d0] sm:$0xff]
        %v323 = vld [vmem:[%s196 + $0x3d8] sm:$0xff]
        %v324 = vld [vmem:[%s196 + $0x3e0] sm:$0xff]
        %v325 = vld [vmem:[%s196 + $0x3e8] sm:$0xff]
        %v326 = vld [vmem:[%s196 + $0x3f0] sm:$0xff]
        %v327 = vld [vmem:[%s196 + $0x3f8] sm:$0xff]
        %v328 = vpack.c.bf16 %v201, %v200
        %v329 = vpack.c.bf16 %v203, %v202
        %v330 = vpack.c.bf16 %v205, %v204
        %v331 = vpack.c.bf16 %v207, %v206
        %v332 = vpack.c.bf16 %v209, %v208
        %v333 = vpack.c.bf16 %v211, %v210
        %v334 = vpack.c.bf16 %v213, %v212
        %v335 = vpack.c.bf16 %v215, %v214
        %v336 = vpack.c.bf16 %v217, %v216
        %v337 = vpack.c.bf16 %v219, %v218
        %v338 = vpack.c.bf16 %v221, %v220
        %v339 = vpack.c.bf16 %v223, %v222
        %v340 = vpack.c.bf16 %v225, %v224
        %v341 = vpack.c.bf16 %v227, %v226
        %v342 = vpack.c.bf16 %v229, %v228
        %v343 = vpack.c.bf16 %v231, %v230
        %v344 = vpack.c.bf16 %v233, %v232
        %v345 = vpack.c.bf16 %v235, %v234
        %v346 = vpack.c.bf16 %v237, %v236
        %v347 = vpack.c.bf16 %v239, %v238
        %v348 = vpack.c.bf16 %v241, %v240
        %v349 = vpack.c.bf16 %v243, %v242
        %v350 = vpack.c.bf16 %v245, %v244
        %v351 = vpack.c.bf16 %v247, %v246
        %v352 = vpack.c.bf16 %v249, %v248
        %v353 = vpack.c.bf16 %v251, %v250
        %v354 = vpack.c.bf16 %v253, %v252
        %v355 = vpack.c.bf16 %v255, %v254
        %v356 = vpack.c.bf16 %v257, %v256
        %v357 = vpack.c.bf16 %v259, %v258
        %v358 = vpack.c.bf16 %v261, %v260
        %v359 = vpack.c.bf16 %v263, %v262
        %v360 = vpack.c.bf16 %v265, %v264
        %v361 = vpack.c.bf16 %v267, %v266
        %v362 = vpack.c.bf16 %v269, %v268
        %v363 = vpack.c.bf16 %v271, %v270
        %v364 = vpack.c.bf16 %v273, %v272
        %v365 = vpack.c.bf16 %v275, %v274
        %v366 = vpack.c.bf16 %v277, %v276
        %v367 = vpack.c.bf16 %v279, %v278
        %v368 = vpack.c.bf16 %v281, %v280
        %v369 = vpack.c.bf16 %v283, %v282
        %v370 = vpack.c.bf16 %v285, %v284
        %v371 = vpack.c.bf16 %v287, %v286
        %v372 = vpack.c.bf16 %v289, %v288
        %v373 = vpack.c.bf16 %v291, %v290
        %v374 = vpack.c.bf16 %v293, %v292
        %v375 = vpack.c.bf16 %v295, %v294
        %v376 = vpack.c.bf16 %v297, %v296
        %v377 = vpack.c.bf16 %v299, %v298
        %v378 = vpack.c.bf16 %v301, %v300
        %v379 = vpack.c.bf16 %v303, %v302
        %v380 = vpack.c.bf16 %v305, %v304
        %v381 = vpack.c.bf16 %v307, %v306
        %v382 = vpack.c.bf16 %v309, %v308
        %v383 = vpack.c.bf16 %v311, %v310
        %v384 = vpack.c.bf16 %v313, %v312
        %v385 = vpack.c.bf16 %v315, %v314
        %v386 = vpack.c.bf16 %v317, %v316
        %v387 = vpack.c.bf16 %v319, %v318
        %v388 = vpack.c.bf16 %v321, %v320
        %v389 = vpack.c.bf16 %v323, %v322
        %v390 = vpack.c.bf16 %v325, %v324
        %v391 = vpack.c.bf16 %v327, %v326
        %v392 = vld [vmem:[%s1] sm:$0xf]
        %v393 = vld [vmem:[%s1 + $0x4] sm:$0xf]
        %v394 = vld [vmem:[%s1 + $0x8] sm:$0xf]
        %v395 = vld [vmem:[%s1 + $0xc] sm:$0xf]
        %v396 = vld [vmem:[%s3] sm:$0x1]
        %v397 = vlaneseq
        %v398 = vshrl.u32 %v397, 7
        %v399 = vsub.s32 0, %v398
        %v400 = vrot.slane %v396, %v399
        %v405 = vunpack.c.l.b16 %v392
        %v406 = vunpack.c.l.b16 %v393
        %v407 = vunpack.c.l.b16 %v394
        %v408 = vunpack.c.l.b16 %v395
        %v409 = vpack.c.b16 %v406, %v405
        %v410 = vpack.c.b16 %v408, %v407
        %vm413 = vcmask 261120
        %v415 = vsel %vm413, %v328, 0
        %v418 = vsel %vm413, %v329, 0
        %v421 = vsel %vm413, %v330, 0
        %v424 = vsel %vm413, %v331, 0
        %v427 = vsel %vm413, %v332, 0
        %v430 = vsel %vm413, %v333, 0
        %v433 = vsel %vm413, %v334, 0
        %v436 = vsel %vm413, %v335, 0
        %v439 = vsel %vm413, %v336, 0
        %v442 = vsel %vm413, %v337, 0
        %v445 = vsel %vm413, %v338, 0
        %v448 = vsel %vm413, %v339, 0
        %v451 = vsel %vm413, %v340, 0
        %v454 = vsel %vm413, %v341, 0
        %v457 = vsel %vm413, %v342, 0
        %v460 = vsel %vm413, %v343, 0
        %v463 = vsel %vm413, %v344, 0
        %v466 = vsel %vm413, %v345, 0
        %v469 = vsel %vm413, %v346, 0
        %v472 = vsel %vm413, %v347, 0
        %v475 = vsel %vm413, %v348, 0
        %v478 = vsel %vm413, %v349, 0
        %v481 = vsel %vm413, %v350, 0
        %v484 = vsel %vm413, %v351, 0
        %v487 = vsel %vm413, %v352, 0
        %v490 = vsel %vm413, %v353, 0
        %v493 = vsel %vm413, %v354, 0
        %v496 = vsel %vm413, %v355, 0
        %v499 = vsel %vm413, %v356, 0
        %v502 = vsel %vm413, %v357, 0
        %v505 = vsel %vm413, %v358, 0
        %v508 = vsel %vm413, %v359, 0
        %v511 = vsel %vm413, %v360, 0
        %v514 = vsel %vm413, %v361, 0
        %v517 = vsel %vm413, %v362, 0
        %v520 = vsel %vm413, %v363, 0
        %v523 = vsel %vm413, %v364, 0
        %v526 = vsel %vm413, %v365, 0
        %v529 = vsel %vm413, %v366, 0
        %v532 = vsel %vm413, %v367, 0
        %v535 = vsel %vm413, %v368, 0
        %v538 = vsel %vm413, %v369, 0
        %v541 = vsel %vm413, %v370, 0
        %v544 = vsel %vm413, %v371, 0
        %v547 = vsel %vm413, %v372, 0
        %v550 = vsel %vm413, %v373, 0
        %v553 = vsel %vm413, %v374, 0
        %v556 = vsel %vm413, %v375, 0
        %v559 = vsel %vm413, %v376, 0
        %v562 = vsel %vm413, %v377, 0
        %v565 = vsel %vm413, %v378, 0
        %v568 = vsel %vm413, %v379, 0
        %v571 = vsel %vm413, %v380, 0
        %v574 = vsel %vm413, %v381, 0
        %v577 = vsel %vm413, %v382, 0
        %v580 = vsel %vm413, %v383, 0
        %v583 = vsel %vm413, %v384, 0
        %v586 = vsel %vm413, %v385, 0
        %v589 = vsel %vm413, %v386, 0
        %v592 = vsel %vm413, %v387, 0
        %v595 = vsel %vm413, %v388, 0
        %v598 = vsel %vm413, %v389, 0
        %v601 = vsel %vm413, %v390, 0
        %v604 = vsel %vm413, %v391, 0
        %606 = vmatprep.subr.bf16.mxu0 0
        %607 = vmatpush1.bf16.msra.mxu0 %v409
        %608 = vmatprep.subr.bf16.mxu0 0
        %609 = vmatpush1.bf16.msra.mxu0 %v410
        %610 = vmatprep.subr.bf16.mxu0 0
        %611 = vmatpush1.bf16.msra.mxu0 0
        %612 = vmatprep.subr.bf16.mxu0 0
        %613 = vmatpush1.bf16.msra.mxu0 0
        %614 = vmatprep.subr.bf16.mxu0 0
        %615 = vmatpush1.bf16.msra.mxu0 0
        %616 = vmatprep.subr.bf16.mxu0 0
        %617 = vmatpush1.bf16.msra.mxu0 0
        %618 = vmatprep.subr.bf16.mxu0 0
        %619 = vmatpush1.bf16.msra.mxu0 0
        %620 = vmatprep.subr.bf16.mxu0 0
        %621 = vmatpush1.bf16.msra.mxu0 0
        %622 = vmatprep.subr.bf16.mxu0 0
        %623 = vmatpush1.bf16.msra.mxu0 0
        %624 = vmatprep.subr.bf16.mxu0 0
        %625 = vmatpush1.bf16.msra.mxu0 0
        %626 = vmatprep.subr.bf16.mxu0 0
        %627 = vmatpush1.bf16.msra.mxu0 0
        %628 = vmatprep.subr.bf16.mxu0 0
        %629 = vmatpush1.bf16.msra.mxu0 0
        %630 = vmatprep.subr.bf16.mxu0 0
        %631 = vmatpush1.bf16.msra.mxu0 0
        %632 = vmatprep.subr.bf16.mxu0 0
        %633 = vmatpush1.bf16.msra.mxu0 0
        %634 = vmatprep.subr.bf16.mxu0 0
        %635 = vmatpush1.bf16.msra.mxu0 0
        %636 = vmatprep.subr.bf16.mxu0 0
        %637 = vmatpush1.bf16.msra.mxu0 0
        %638 = vmatprep.mubr.bf16.mxu0 0
        %639 = vmatmul.mubr.bf16.gmra.mrb[0].mxu0 %v415
        %v640 = vpop.f32.mrb[0].mxu0
        %v641 = vadd.f32 %v400, %v640
        %v642 = vpop.f32.mrb[0].mxu0
        %v643 = vpop.f32.mrb[0].mxu0
        %v644 = vadd.f32 %v400, %v643
        %v645 = vpop.f32.mrb[0].mxu0
        %646 = vmatprep.mubr.bf16.mxu0 0
        %647 = vmatmul.mubr.bf16.gmra.mrb[0].mxu0 %v418
        %v648 = vpop.f32.mrb[0].mxu0
        %v649 = vadd.f32 %v400, %v648
        %v650 = vpop.f32.mrb[0].mxu0
        %v651 = vpop.f32.mrb[0].mxu0
        %v652 = vadd.f32 %v400, %v651
        %v653 = vpop.f32.mrb[0].mxu0
        %654 = vmatprep.mubr.bf16.mxu0 0
        %655 = vmatmul.mubr.bf16.gmra.mrb[0].mxu0 %v421
        %v656 = vpop.f32.mrb[0].mxu0
        %v657 = vadd.f32 %v400, %v656
        %v658 = vpop.f32.mrb[0].mxu0
        %v659 = vpop.f32.mrb[0].mxu0
        %v660 = vadd.f32 %v400, %v659
        %v661 = vpop.f32.mrb[0].mxu0
        %662 = vmatprep.mubr.bf16.mxu0 0
        %663 = vmatmul.mubr.bf16.gmra.mrb[0].mxu0 %v424
        %v664 = vpop.f32.mrb[0].mxu0
        %v665 = vadd.f32 %v400, %v664
        %v666 = vpop.f32.mrb[0].mxu0
        %v667 = vpop.f32.mrb[0].mxu0
        %v668 = vadd.f32 %v400, %v667
        %v669 = vpop.f32.mrb[0].mxu0
        %670 = vmatprep.mubr.bf16.mxu0 0
        %671 = vmatmul.mubr.bf16.gmra.mrb[0].mxu0 %v427
        %v672 = vpop.f32.mrb[0].mxu0
        %v673 = vadd.f32 %v400, %v672
        %v674 = vpop.f32.mrb[0].mxu0
        %v675 = vpop.f32.mrb[0].mxu0
        %v676 = vadd.f32 %v400, %v675
        %v677 = vpop.f32.mrb[0].mxu0
        %678 = vmatprep.mubr.bf16.mxu0 0
        %679 = vmatmul.mubr.bf16.gmra.mrb[0].mxu0 %v430
        %v680 = vpop.f32.mrb[0].mxu0
        %v681 = vadd.f32 %v400, %v680
        %v682 = vpop.f32.mrb[0].mxu0
        %v683 = vpop.f32.mrb[0].mxu0
        %v684 = vadd.f32 %v400, %v683
        %v685 = vpop.f32.mrb[0].mxu0
        %686 = vmatprep.mubr.bf16.mxu0 0
        %687 = vmatmul.mubr.bf16.gmra.mrb[0].mxu0 %v433
        %v688 = vpop.f32.mrb[0].mxu0
        %v689 = vadd.f32 %v400, %v688
        %v690 = vpop.f32.mrb[0].mxu0
        %v691 = vpop.f32.mrb[0].mxu0
        %v692 = vadd.f32 %v400, %v691
        %v693 = vpop.f32.mrb[0].mxu0
        %694 = vmatprep.mubr.bf16.mxu0 0
        %695 = vmatmul.mubr.bf16.gmra.mrb[0].mxu0 %v436
        %v696 = vpop.f32.mrb[0].mxu0
        %v697 = vadd.f32 %v400, %v696
        %v698 = vpop.f32.mrb[0].mxu0
        %v699 = vpop.f32.mrb[0].mxu0
        %v700 = vadd.f32 %v400, %v699
        %v701 = vpop.f32.mrb[0].mxu0
        %702 = vmatprep.mubr.bf16.mxu0 0
        %703 = vmatmul.mubr.bf16.gmra.mrb[0].mxu0 %v439
        %v704 = vpop.f32.mrb[0].mxu0
        %v705 = vadd.f32 %v400, %v704
        %v706 = vpop.f32.mrb[0].mxu0
        %v707 = vpop.f32.mrb[0].mxu0
        %v708 = vadd.f32 %v400, %v707
        %v709 = vpop.f32.mrb[0].mxu0
        %710 = vmatprep.mubr.bf16.mxu0 0
        %711 = vmatmul.mubr.bf16.gmra.mrb[0].mxu0 %v442
        %v712 = vpop.f32.mrb[0].mxu0
        %v713 = vadd.f32 %v400, %v712
        %v714 = vpop.f32.mrb[0].mxu0
        %v715 = vpop.f32.mrb[0].mxu0
        %v716 = vadd.f32 %v400, %v715
        %v717 = vpop.f32.mrb[0].mxu0
        %718 = vmatprep.mubr.bf16.mxu0 0
        %719 = vmatmul.mubr.bf16.gmra.mrb[0].mxu0 %v445
        %v720 = vpop.f32.mrb[0].mxu0
        %v721 = vadd.f32 %v400, %v720
        %v722 = vpop.f32.mrb[0].mxu0
        %v723 = vpop.f32.mrb[0].mxu0
        %v724 = vadd.f32 %v400, %v723
        %v725 = vpop.f32.mrb[0].mxu0
        %726 = vmatprep.mubr.bf16.mxu0 0
        %727 = vmatmul.mubr.bf16.gmra.mrb[0].mxu0 %v448
        %v728 = vpop.f32.mrb[0].mxu0
        %v729 = vadd.f32 %v400, %v728
        %v730 = vpop.f32.mrb[0].mxu0
        %v731 = vpop.f32.mrb[0].mxu0
        %v732 = vadd.f32 %v400, %v731
        %v733 = vpop.f32.mrb[0].mxu0
        %734 = vmatprep.mubr.bf16.mxu0 0
        %735 = vmatmul.mubr.bf16.gmra.mrb[0].mxu0 %v451
        %v736 = vpop.f32.mrb[0].mxu0
        %v737 = vadd.f32 %v400, %v736
        %v738 = vpop.f32.mrb[0].mxu0
        %v739 = vpop.f32.mrb[0].mxu0
        %v740 = vadd.f32 %v400, %v739
        %v741 = vpop.f32.mrb[0].mxu0
        %742 = vmatprep.mubr.bf16.mxu0 0
        %743 = vmatmul.mubr.bf16.gmra.mrb[0].mxu0 %v454
        %v744 = vpop.f32.mrb[0].mxu0
        %v745 = vadd.f32 %v400, %v744
        %v746 = vpop.f32.mrb[0].mxu0
        %v747 = vpop.f32.mrb[0].mxu0
        %v748 = vadd.f32 %v400, %v747
        %v749 = vpop.f32.mrb[0].mxu0
        %750 = vmatprep.mubr.bf16.mxu0 0
        %751 = vmatmul.mubr.bf16.gmra.mrb[0].mxu0 %v457
        %v752 = vpop.f32.mrb[0].mxu0
        %v753 = vadd.f32 %v400, %v752
        %v754 = vpop.f32.mrb[0].mxu0
        %v755 = vpop.f32.mrb[0].mxu0
        %v756 = vadd.f32 %v400, %v755
        %v757 = vpop.f32.mrb[0].mxu0
        %758 = vmatprep.mubr.bf16.mxu0 0
        %759 = vmatmul.mubr.bf16.gmra.mrb[0].mxu0 %v460
        %v760 = vpop.f32.mrb[0].mxu0
        %v761 = vadd.f32 %v400, %v760
        %v762 = vpop.f32.mrb[0].mxu0
        %v763 = vpop.f32.mrb[0].mxu0
        %v764 = vadd.f32 %v400, %v763
        %v765 = vpop.f32.mrb[0].mxu0
        %766 = vmatprep.mubr.bf16.mxu0 0
        %767 = vmatmul.mubr.bf16.gmra.mrb[0].mxu0 %v463
        %v768 = vpop.f32.mrb[0].mxu0
        %v769 = vadd.f32 %v400, %v768
        %v770 = vpop.f32.mrb[0].mxu0
        %v771 = vpop.f32.mrb[0].mxu0
        %v772 = vadd.f32 %v400, %v771
        %v773 = vpop.f32.mrb[0].mxu0
        %774 = vmatprep.mubr.bf16.mxu0 0
        %775 = vmatmul.mubr.bf16.gmra.mrb[0].mxu0 %v466
        %v776 = vpop.f32.mrb[0].mxu0
        %v777 = vadd.f32 %v400, %v776
        %v778 = vpop.f32.mrb[0].mxu0
        %v779 = vpop.f32.mrb[0].mxu0
        %v780 = vadd.f32 %v400, %v779
        %v781 = vpop.f32.mrb[0].mxu0
        %782 = vmatprep.mubr.bf16.mxu0 0
        %783 = vmatmul.mubr.bf16.gmra.mrb[0].mxu0 %v469
        %v784 = vpop.f32.mrb[0].mxu0
        %v785 = vadd.f32 %v400, %v784
        %v786 = vpop.f32.mrb[0].mxu0
        %v787 = vpop.f32.mrb[0].mxu0
        %v788 = vadd.f32 %v400, %v787
        %v789 = vpop.f32.mrb[0].mxu0
        %790 = vmatprep.mubr.bf16.mxu0 0
        %791 = vmatmul.mubr.bf16.gmra.mrb[0].mxu0 %v472
        %v792 = vpop.f32.mrb[0].mxu0
        %v793 = vadd.f32 %v400, %v792
        %v794 = vpop.f32.mrb[0].mxu0
        %v795 = vpop.f32.mrb[0].mxu0
        %v796 = vadd.f32 %v400, %v795
        %v797 = vpop.f32.mrb[0].mxu0
        %798 = vmatprep.mubr.bf16.mxu0 0
        %799 = vmatmul.mubr.bf16.gmra.mrb[0].mxu0 %v475
        %v800 = vpop.f32.mrb[0].mxu0
        %v801 = vadd.f32 %v400, %v800
        %v802 = vpop.f32.mrb[0].mxu0
        %v803 = vpop.f32.mrb[0].mxu0
        %v804 = vadd.f32 %v400, %v803
        %v805 = vpop.f32.mrb[0].mxu0
        %806 = vmatprep.mubr.bf16.mxu0 0
        %807 = vmatmul.mubr.bf16.gmra.mrb[0].mxu0 %v478
        %v808 = vpop.f32.mrb[0].mxu0
        %v809 = vadd.f32 %v400, %v808
        %v810 = vpop.f32.mrb[0].mxu0
        %v811 = vpop.f32.mrb[0].mxu0
        %v812 = vadd.f32 %v400, %v811
        %v813 = vpop.f32.mrb[0].mxu0
        %814 = vmatprep.mubr.bf16.mxu0 0
        %815 = vmatmul.mubr.bf16.gmra.mrb[0].mxu0 %v481
        %v816 = vpop.f32.mrb[0].mxu0
        %v817 = vadd.f32 %v400, %v816
        %v818 = vpop.f32.mrb[0].mxu0
        %v819 = vpop.f32.mrb[0].mxu0
        %v820 = vadd.f32 %v400, %v819
        %v821 = vpop.f32.mrb[0].mxu0
        %822 = vmatprep.mubr.bf16.mxu0 0
        %823 = vmatmul.mubr.bf16.gmra.mrb[0].mxu0 %v484
        %v824 = vpop.f32.mrb[0].mxu0
        %v825 = vadd.f32 %v400, %v824
        %v826 = vpop.f32.mrb[0].mxu0
        %v827 = vpop.f32.mrb[0].mxu0
        %v828 = vadd.f32 %v400, %v827
        %v829 = vpop.f32.mrb[0].mxu0
        %830 = vmatprep.mubr.bf16.mxu0 0
        %831 = vmatmul.mubr.bf16.gmra.mrb[0].mxu0 %v487
        %v832 = vpop.f32.mrb[0].mxu0
        %v833 = vadd.f32 %v400, %v832
        %v834 = vpop.f32.mrb[0].mxu0
        %v835 = vpop.f32.mrb[0].mxu0
        %v836 = vadd.f32 %v400, %v835
        %v837 = vpop.f32.mrb[0].mxu0
        %838 = vmatprep.mubr.bf16.mxu0 0
        %839 = vmatmul.mubr.bf16.gmra.mrb[0].mxu0 %v490
        %v840 = vpop.f32.mrb[0].mxu0
        %v841 = vadd.f32 %v400, %v840
        %v842 = vpop.f32.mrb[0].mxu0
        %v843 = vpop.f32.mrb[0].mxu0
        %v844 = vadd.f32 %v400, %v843
        %v845 = vpop.f32.mrb[0].mxu0
        %846 = vmatprep.mubr.bf16.mxu0 0
        %847 = vmatmul.mubr.bf16.gmra.mrb[0].mxu0 %v493
        %v848 = vpop.f32.mrb[0].mxu0
        %v849 = vadd.f32 %v400, %v848
        %v850 = vpop.f32.mrb[0].mxu0
        %v851 = vpop.f32.mrb[0].mxu0
        %v852 = vadd.f32 %v400, %v851
        %v853 = vpop.f32.mrb[0].mxu0
        %854 = vmatprep.mubr.bf16.mxu0 0
        %855 = vmatmul.mubr.bf16.gmra.mrb[0].mxu0 %v496
        %v856 = vpop.f32.mrb[0].mxu0
        %v857 = vadd.f32 %v400, %v856
        %v858 = vpop.f32.mrb[0].mxu0
        %v859 = vpop.f32.mrb[0].mxu0
        %v860 = vadd.f32 %v400, %v859
        %v861 = vpop.f32.mrb[0].mxu0
        %862 = vmatprep.mubr.bf16.mxu0 0
        %863 = vmatmul.mubr.bf16.gmra.mrb[0].mxu0 %v499
        %v864 = vpop.f32.mrb[0].mxu0
        %v865 = vadd.f32 %v400, %v864
        %v866 = vpop.f32.mrb[0].mxu0
        %v867 = vpop.f32.mrb[0].mxu0
        %v868 = vadd.f32 %v400, %v867
        %v869 = vpop.f32.mrb[0].mxu0
        %870 = vmatprep.mubr.bf16.mxu0 0
        %871 = vmatmul.mubr.bf16.gmra.mrb[0].mxu0 %v502
        %v872 = vpop.f32.mrb[0].mxu0
        %v873 = vadd.f32 %v400, %v872
        %v874 = vpop.f32.mrb[0].mxu0
        %v875 = vpop.f32.mrb[0].mxu0
        %v876 = vadd.f32 %v400, %v875
        %v877 = vpop.f32.mrb[0].mxu0
        %878 = vmatprep.mubr.bf16.mxu0 0
        %879 = vmatmul.mubr.bf16.gmra.mrb[0].mxu0 %v505
        %v880 = vpop.f32.mrb[0].mxu0
        %v881 = vadd.f32 %v400, %v880
        %v882 = vpop.f32.mrb[0].mxu0
        %v883 = vpop.f32.mrb[0].mxu0
        %v884 = vadd.f32 %v400, %v883
        %v885 = vpop.f32.mrb[0].mxu0
        %886 = vmatprep.mubr.bf16.mxu0 0
        %887 = vmatmul.mubr.bf16.gmra.mrb[0].mxu0 %v508
        %v888 = vpop.f32.mrb[0].mxu0
        %v889 = vadd.f32 %v400, %v888
        %v890 = vpop.f32.mrb[0].mxu0
        %v891 = vpop.f32.mrb[0].mxu0
        %v892 = vadd.f32 %v400, %v891
        %v893 = vpop.f32.mrb[0].mxu0
        %894 = vmatprep.mubr.bf16.mxu0 0
        %895 = vmatmul.mubr.bf16.gmra.mrb[0].mxu0 %v511
        %v896 = vpop.f32.mrb[0].mxu0
        %v897 = vadd.f32 %v400, %v896
        %v898 = vpop.f32.mrb[0].mxu0
        %v899 = vpop.f32.mrb[0].mxu0
        %v900 = vadd.f32 %v400, %v899
        %v901 = vpop.f32.mrb[0].mxu0
        %902 = vmatprep.mubr.bf16.mxu0 0
        %903 = vmatmul.mubr.bf16.gmra.mrb[0].mxu0 %v514
        %v904 = vpop.f32.mrb[0].mxu0
        %v905 = vadd.f32 %v400, %v904
        %v906 = vpop.f32.mrb[0].mxu0
        %v907 = vpop.f32.mrb[0].mxu0
        %v908 = vadd.f32 %v400, %v907
        %v909 = vpop.f32.mrb[0].mxu0
        %910 = vmatprep.mubr.bf16.mxu0 0
        %911 = vmatmul.mubr.bf16.gmra.mrb[0].mxu0 %v517
        %v912 = vpop.f32.mrb[0].mxu0
        %v913 = vadd.f32 %v400, %v912
        %v914 = vpop.f32.mrb[0].mxu0
        %v915 = vpop.f32.mrb[0].mxu0
        %v916 = vadd.f32 %v400, %v915
        %v917 = vpop.f32.mrb[0].mxu0
        %918 = vmatprep.mubr.bf16.mxu0 0
        %919 = vmatmul.mubr.bf16.gmra.mrb[0].mxu0 %v520
        %v920 = vpop.f32.mrb[0].mxu0
        %v921 = vadd.f32 %v400, %v920
        %v922 = vpop.f32.mrb[0].mxu0
        %v923 = vpop.f32.mrb[0].mxu0
        %v924 = vadd.f32 %v400, %v923
        %v925 = vpop.f32.mrb[0].mxu0
        %926 = vmatprep.mubr.bf16.mxu0 0
        %927 = vmatmul.mubr.bf16.gmra.mrb[0].mxu0 %v523
        %v928 = vpop.f32.mrb[0].mxu0
        %v929 = vadd.f32 %v400, %v928
        %v930 = vpop.f32.mrb[0].mxu0
        %v931 = vpop.f32.mrb[0].mxu0
        %v932 = vadd.f32 %v400, %v931
        %v933 = vpop.f32.mrb[0].mxu0
        %934 = vmatprep.mubr.bf16.mxu0 0
        %935 = vmatmul.mubr.bf16.gmra.mrb[0].mxu0 %v526
        %v936 = vpop.f32.mrb[0].mxu0
        %v937 = vadd.f32 %v400, %v936
        %v938 = vpop.f32.mrb[0].mxu0
        %v939 = vpop.f32.mrb[0].mxu0
        %v940 = vadd.f32 %v400, %v939
        %v941 = vpop.f32.mrb[0].mxu0
        %942 = vmatprep.mubr.bf16.mxu0 0
        %943 = vmatmul.mubr.bf16.gmra.mrb[0].mxu0 %v529
        %v944 = vpop.f32.mrb[0].mxu0
        %v945 = vadd.f32 %v400, %v944
        %v946 = vpop.f32.mrb[0].mxu0
        %v947 = vpop.f32.mrb[0].mxu0
        %v948 = vadd.f32 %v400, %v947
        %v949 = vpop.f32.mrb[0].mxu0
        %950 = vmatprep.mubr.bf16.mxu0 0
        %951 = vmatmul.mubr.bf16.gmra.mrb[0].mxu0 %v532
        %v952 = vpop.f32.mrb[0].mxu0
        %v953 = vadd.f32 %v400, %v952
        %v954 = vpop.f32.mrb[0].mxu0
        %v955 = vpop.f32.mrb[0].mxu0
        %v956 = vadd.f32 %v400, %v955
        %v957 = vpop.f32.mrb[0].mxu0
        %958 = vmatprep.mubr.bf16.mxu0 0
        %959 = vmatmul.mubr.bf16.gmra.mrb[0].mxu0 %v535
        %v960 = vpop.f32.mrb[0].mxu0
        %v961 = vadd.f32 %v400, %v960
        %v962 = vpop.f32.mrb[0].mxu0
        %v963 = vpop.f32.mrb[0].mxu0
        %v964 = vadd.f32 %v400, %v963
        %v965 = vpop.f32.mrb[0].mxu0
        %966 = vmatprep.mubr.bf16.mxu0 0
        %967 = vmatmul.mubr.bf16.gmra.mrb[0].mxu0 %v538
        %v968 = vpop.f32.mrb[0].mxu0
        %v969 = vadd.f32 %v400, %v968
        %v970 = vpop.f32.mrb[0].mxu0
        %v971 = vpop.f32.mrb[0].mxu0
        %v972 = vadd.f32 %v400, %v971
        %v973 = vpop.f32.mrb[0].mxu0
        %974 = vmatprep.mubr.bf16.mxu0 0
        %975 = vmatmul.mubr.bf16.gmra.mrb[0].mxu0 %v541
        %v976 = vpop.f32.mrb[0].mxu0
        %v977 = vadd.f32 %v400, %v976
        %v978 = vpop.f32.mrb[0].mxu0
        %v979 = vpop.f32.mrb[0].mxu0
        %v980 = vadd.f32 %v400, %v979
        %v981 = vpop.f32.mrb[0].mxu0
        %982 = vmatprep.mubr.bf16.mxu0 0
        %983 = vmatmul.mubr.bf16.gmra.mrb[0].mxu0 %v544
        %v984 = vpop.f32.mrb[0].mxu0
        %v985 = vadd.f32 %v400, %v984
        %v986 = vpop.f32.mrb[0].mxu0
        %v987 = vpop.f32.mrb[0].mxu0
        %v988 = vadd.f32 %v400, %v987
        %v989 = vpop.f32.mrb[0].mxu0
        %990 = vmatprep.mubr.bf16.mxu0 0
        %991 = vmatmul.mubr.bf16.gmra.mrb[0].mxu0 %v547
        %v992 = vpop.f32.mrb[0].mxu0
        %v993 = vadd.f32 %v400, %v992
        %v994 = vpop.f32.mrb[0].mxu0
        %v995 = vpop.f32.mrb[0].mxu0
        %v996 = vadd.f32 %v400, %v995
        %v997 = vpop.f32.mrb[0].mxu0
        %998 = vmatprep.mubr.bf16.mxu0 0
        %999 = vmatmul.mubr.bf16.gmra.mrb[0].mxu0 %v550
        %v1000 = vpop.f32.mrb[0].mxu0
        %v1001 = vadd.f32 %v400, %v1000
        %v1002 = vpop.f32.mrb[0].mxu0
        %v1003 = vpop.f32.mrb[0].mxu0
        %v1004 = vadd.f32 %v400, %v1003
        %v1005 = vpop.f32.mrb[0].mxu0
        %1006 = vmatprep.mubr.bf16.mxu0 0
        %1007 = vmatmul.mubr.bf16.gmra.mrb[0].mxu0 %v553
        %v1008 = vpop.f32.mrb[0].mxu0
        %v1009 = vadd.f32 %v400, %v1008
        %v1010 = vpop.f32.mrb[0].mxu0
        %v1011 = vpop.f32.mrb[0].mxu0
        %v1012 = vadd.f32 %v400, %v1011
        %v1013 = vpop.f32.mrb[0].mxu0
        %1014 = vmatprep.mubr.bf16.mxu0 0
        %1015 = vmatmul.mubr.bf16.gmra.mrb[0].mxu0 %v556
        %v1016 = vpop.f32.mrb[0].mxu0
        %v1017 = vadd.f32 %v400, %v1016
        %v1018 = vpop.f32.mrb[0].mxu0
        %v1019 = vpop.f32.mrb[0].mxu0
        %v1020 = vadd.f32 %v400, %v1019
        %v1021 = vpop.f32.mrb[0].mxu0
        %1022 = vmatprep.mubr.bf16.mxu0 0
        %1023 = vmatmul.mubr.bf16.gmra.mrb[0].mxu0 %v559
        %v1024 = vpop.f32.mrb[0].mxu0
        %v1025 = vadd.f32 %v400, %v1024
        %v1026 = vpop.f32.mrb[0].mxu0
        %v1027 = vpop.f32.mrb[0].mxu0
        %v1028 = vadd.f32 %v400, %v1027
        %v1029 = vpop.f32.mrb[0].mxu0
        %1030 = vmatprep.mubr.bf16.mxu0 0
        %1031 = vmatmul.mubr.bf16.gmra.mrb[0].mxu0 %v562
        %v1032 = vpop.f32.mrb[0].mxu0
        %v1033 = vadd.f32 %v400, %v1032
        %v1034 = vpop.f32.mrb[0].mxu0
        %v1035 = vpop.f32.mrb[0].mxu0
        %v1036 = vadd.f32 %v400, %v1035
        %v1037 = vpop.f32.mrb[0].mxu0
        %1038 = vmatprep.mubr.bf16.mxu0 0
        %1039 = vmatmul.mubr.bf16.gmra.mrb[0].mxu0 %v565
        %v1040 = vpop.f32.mrb[0].mxu0
        %v1041 = vadd.f32 %v400, %v1040
        %v1042 = vpop.f32.mrb[0].mxu0
        %v1043 = vpop.f32.mrb[0].mxu0
        %v1044 = vadd.f32 %v400, %v1043
        %v1045 = vpop.f32.mrb[0].mxu0
        %1046 = vmatprep.mubr.bf16.mxu0 0
        %1047 = vmatmul.mubr.bf16.gmra.mrb[0].mxu0 %v568
        %v1048 = vpop.f32.mrb[0].mxu0
        %v1049 = vadd.f32 %v400, %v1048
        %v1050 = vpop.f32.mrb[0].mxu0
        %v1051 = vpop.f32.mrb[0].mxu0
        %v1052 = vadd.f32 %v400, %v1051
        %v1053 = vpop.f32.mrb[0].mxu0
        %1054 = vmatprep.mubr.bf16.mxu0 0
        %1055 = vmatmul.mubr.bf16.gmra.mrb[0].mxu0 %v571
        %v1056 = vpop.f32.mrb[0].mxu0
        %v1057 = vadd.f32 %v400, %v1056
        %v1058 = vpop.f32.mrb[0].mxu0
        %v1059 = vpop.f32.mrb[0].mxu0
        %v1060 = vadd.f32 %v400, %v1059
        %v1061 = vpop.f32.mrb[0].mxu0
        %1062 = vmatprep.mubr.bf16.mxu0 0
        %1063 = vmatmul.mubr.bf16.gmra.mrb[0].mxu0 %v574
        %v1064 = vpop.f32.mrb[0].mxu0
        %v1065 = vadd.f32 %v400, %v1064
        %v1066 = vpop.f32.mrb[0].mxu0
        %v1067 = vpop.f32.mrb[0].mxu0
        %v1068 = vadd.f32 %v400, %v1067
        %v1069 = vpop.f32.mrb[0].mxu0
        %1070 = vmatprep.mubr.bf16.mxu0 0
        %1071 = vmatmul.mubr.bf16.gmra.mrb[0].mxu0 %v577
        %v1072 = vpop.f32.mrb[0].mxu0
        %v1073 = vadd.f32 %v400, %v1072
        %v1074 = vpop.f32.mrb[0].mxu0
        %v1075 = vpop.f32.mrb[0].mxu0
        %v1076 = vadd.f32 %v400, %v1075
        %v1077 = vpop.f32.mrb[0].mxu0
        %1078 = vmatprep.mubr.bf16.mxu0 0
        %1079 = vmatmul.mubr.bf16.gmra.mrb[0].mxu0 %v580
        %v1080 = vpop.f32.mrb[0].mxu0
        %v1081 = vadd.f32 %v400, %v1080
        %v1082 = vpop.f32.mrb[0].mxu0
        %v1083 = vpop.f32.mrb[0].mxu0
        %v1084 = vadd.f32 %v400, %v1083
        %v1085 = vpop.f32.mrb[0].mxu0
        %1086 = vmatprep.mubr.bf16.mxu0 0
        %1087 = vmatmul.mubr.bf16.gmra.mrb[0].mxu0 %v583
        %v1088 = vpop.f32.mrb[0].mxu0
        %v1089 = vadd.f32 %v400, %v1088
        %v1090 = vpop.f32.mrb[0].mxu0
        %v1091 = vpop.f32.mrb[0].mxu0
        %v1092 = vadd.f32 %v400, %v1091
        %v1093 = vpop.f32.mrb[0].mxu0
        %1094 = vmatprep.mubr.bf16.mxu0 0
        %1095 = vmatmul.mubr.bf16.gmra.mrb[0].mxu0 %v586
        %v1096 = vpop.f32.mrb[0].mxu0
        %v1097 = vadd.f32 %v400, %v1096
        %v1098 = vpop.f32.mrb[0].mxu0
        %v1099 = vpop.f32.mrb[0].mxu0
        %v1100 = vadd.f32 %v400, %v1099
        %v1101 = vpop.f32.mrb[0].mxu0
        %1102 = vmatprep.mubr.bf16.mxu0 0
        %1103 = vmatmul.mubr.bf16.gmra.mrb[0].mxu0 %v589
        %v1104 = vpop.f32.mrb[0].mxu0
        %v1105 = vadd.f32 %v400, %v1104
        %v1106 = vpop.f32.mrb[0].mxu0
        %v1107 = vpop.f32.mrb[0].mxu0
        %v1108 = vadd.f32 %v400, %v1107
        %v1109 = vpop.f32.mrb[0].mxu0
        %1110 = vmatprep.mubr.bf16.mxu0 0
        %1111 = vmatmul.mubr.bf16.gmra.mrb[0].mxu0 %v592
        %v1112 = vpop.f32.mrb[0].mxu0
        %v1113 = vadd.f32 %v400, %v1112
        %v1114 = vpop.f32.mrb[0].mxu0
        %v1115 = vpop.f32.mrb[0].mxu0
        %v1116 = vadd.f32 %v400, %v1115
        %v1117 = vpop.f32.mrb[0].mxu0
        %1118 = vmatprep.mubr.bf16.mxu0 0
        %1119 = vmatmul.mubr.bf16.gmra.mrb[0].mxu0 %v595
        %v1120 = vpop.f32.mrb[0].mxu0
        %v1121 = vadd.f32 %v400, %v1120
        %v1122 = vpop.f32.mrb[0].mxu0
        %v1123 = vpop.f32.mrb[0].mxu0
        %v1124 = vadd.f32 %v400, %v1123
        %v1125 = vpop.f32.mrb[0].mxu0
        %1126 = vmatprep.mubr.bf16.mxu0 0
        %1127 = vmatmul.mubr.bf16.gmra.mrb[0].mxu0 %v598
        %v1128 = vpop.f32.mrb[0].mxu0
        %v1129 = vadd.f32 %v400, %v1128
        %v1130 = vpop.f32.mrb[0].mxu0
        %v1131 = vpop.f32.mrb[0].mxu0
        %v1132 = vadd.f32 %v400, %v1131
        %v1133 = vpop.f32.mrb[0].mxu0
        %1134 = vmatprep.mubr.bf16.mxu0 0
        %1135 = vmatmul.mubr.bf16.gmra.mrb[0].mxu0 %v601
        %v1136 = vpop.f32.mrb[0].mxu0
        %v1137 = vadd.f32 %v400, %v1136
        %v1138 = vpop.f32.mrb[0].mxu0
        %v1139 = vpop.f32.mrb[0].mxu0
        %v1140 = vadd.f32 %v400, %v1139
        %v1141 = vpop.f32.mrb[0].mxu0
        %1142 = vmatprep.mubr.bf16.mxu0 0
        %1143 = vmatmul.mubr.bf16.gmra.mrb[0].mxu0 %v604
        %v1144 = vpop.f32.mrb[0].mxu0
        %v1145 = vadd.f32 %v400, %v1144
        %v1146 = vpop.f32.mrb[0].mxu0
        %v1147 = vpop.f32.mrb[0].mxu0
        %v1148 = vadd.f32 %v400, %v1147
        %v1149 = vpop.f32.mrb[0].mxu0
        %1150 = vdwg.mxu0
        %v1151 = vmax.f32 %v641, 0.0
        %v1152 = vmax.f32 %v644, 0.0
        %v1153 = vmax.f32 %v649, 0.0
        %v1154 = vmax.f32 %v652, 0.0
        %v1155 = vmax.f32 %v657, 0.0
        %v1156 = vmax.f32 %v660, 0.0
        %v1157 = vmax.f32 %v665, 0.0
        %v1158 = vmax.f32 %v668, 0.0
        %v1159 = vmax.f32 %v673, 0.0
        %v1160 = vmax.f32 %v676, 0.0
        %v1161 = vmax.f32 %v681, 0.0
        %v1162 = vmax.f32 %v684, 0.0
        %v1163 = vmax.f32 %v689, 0.0
        %v1164 = vmax.f32 %v692, 0.0
        %v1165 = vmax.f32 %v697, 0.0
        %v1166 = vmax.f32 %v700, 0.0
        %v1167 = vmax.f32 %v705, 0.0
        %v1168 = vmax.f32 %v708, 0.0
        %v1169 = vmax.f32 %v713, 0.0
        %v1170 = vmax.f32 %v716, 0.0
        %v1171 = vmax.f32 %v721, 0.0
        %v1172 = vmax.f32 %v724, 0.0
        %v1173 = vmax.f32 %v729, 0.0
        %v1174 = vmax.f32 %v732, 0.0
        %v1175 = vmax.f32 %v737, 0.0
        %v1176 = vmax.f32 %v740, 0.0
        %v1177 = vmax.f32 %v745, 0.0
        %v1178 = vmax.f32 %v748, 0.0
        %v1179 = vmax.f32 %v753, 0.0
        %v1180 = vmax.f32 %v756, 0.0
        %v1181 = vmax.f32 %v761, 0.0
        %v1182 = vmax.f32 %v764, 0.0
        %v1183 = vmax.f32 %v769, 0.0
        %v1184 = vmax.f32 %v772, 0.0
        %v1185 = vmax.f32 %v777, 0.0
        %v1186 = vmax.f32 %v780, 0.0
        %v1187 = vmax.f32 %v785, 0.0
        %v1188 = vmax.f32 %v788, 0.0
        %v1189 = vmax.f32 %v793, 0.0
        %v1190 = vmax.f32 %v796, 0.0
        %v1191 = vmax.f32 %v801, 0.0
        %v1192 = vmax.f32 %v804, 0.0
        %v1193 = vmax.f32 %v809, 0.0
        %v1194 = vmax.f32 %v812, 0.0
        %v1195 = vmax.f32 %v817, 0.0
        %v1196 = vmax.f32 %v820, 0.0
        %v1197 = vmax.f32 %v825, 0.0
        %v1198 = vmax.f32 %v828, 0.0
        %v1199 = vmax.f32 %v833, 0.0
        %v1200 = vmax.f32 %v836, 0.0
        %v1201 = vmax.f32 %v841, 0.0
        %v1202 = vmax.f32 %v844, 0.0
        %v1203 = vmax.f32 %v849, 0.0
        %v1204 = vmax.f32 %v852, 0.0
        %v1205 = vmax.f32 %v857, 0.0
        %v1206 = vmax.f32 %v860, 0.0
        %v1207 = vmax.f32 %v865, 0.0
        %v1208 = vmax.f32 %v868, 0.0
        %v1209 = vmax.f32 %v873, 0.0
        %v1210 = vmax.f32 %v876, 0.0
        %v1211 = vmax.f32 %v881, 0.0
        %v1212 = vmax.f32 %v884, 0.0
        %v1213 = vmax.f32 %v889, 0.0
        %v1214 = vmax.f32 %v892, 0.0
        %v1215 = vmax.f32 %v897, 0.0
        %v1216 = vmax.f32 %v900, 0.0
        %v1217 = vmax.f32 %v905, 0.0
        %v1218 = vmax.f32 %v908, 0.0
        %v1219 = vmax.f32 %v913, 0.0
        %v1220 = vmax.f32 %v916, 0.0
        %v1221 = vmax.f32 %v921, 0.0
        %v1222 = vmax.f32 %v924, 0.0
        %v1223 = vmax.f32 %v929, 0.0
        %v1224 = vmax.f32 %v932, 0.0
        %v1225 = vmax.f32 %v937, 0.0
        %v1226 = vmax.f32 %v940, 0.0
        %v1227 = vmax.f32 %v945, 0.0
        %v1228 = vmax.f32 %v948, 0.0
        %v1229 = vmax.f32 %v953, 0.0
        %v1230 = vmax.f32 %v956, 0.0
        %v1231 = vmax.f32 %v961, 0.0
        %v1232 = vmax.f32 %v964, 0.0
        %v1233 = vmax.f32 %v969, 0.0
        %v1234 = vmax.f32 %v972, 0.0
        %v1235 = vmax.f32 %v977, 0.0
        %v1236 = vmax.f32 %v980, 0.0
        %v1237 = vmax.f32 %v985, 0.0
        %v1238 = vmax.f32 %v988, 0.0
        %v1239 = vmax.f32 %v993, 0.0
        %v1240 = vmax.f32 %v996, 0.0
        %v1241 = vmax.f32 %v1001, 0.0
        %v1242 = vmax.f32 %v1004, 0.0
        %v1243 = vmax.f32 %v1009, 0.0
        %v1244 = vmax.f32 %v1012, 0.0
        %v1245 = vmax.f32 %v1017, 0.0
        %v1246 = vmax.f32 %v1020, 0.0
        %v1247 = vmax.f32 %v1025, 0.0
        %v1248 = vmax.f32 %v1028, 0.0
        %v1249 = vmax.f32 %v1033, 0.0
        %v1250 = vmax.f32 %v1036, 0.0
        %v1251 = vmax.f32 %v1041, 0.0
        %v1252 = vmax.f32 %v1044, 0.0
        %v1253 = vmax.f32 %v1049, 0.0
        %v1254 = vmax.f32 %v1052, 0.0
        %v1255 = vmax.f32 %v1057, 0.0
        %v1256 = vmax.f32 %v1060, 0.0
        %v1257 = vmax.f32 %v1065, 0.0
        %v1258 = vmax.f32 %v1068, 0.0
        %v1259 = vmax.f32 %v1073, 0.0
        %v1260 = vmax.f32 %v1076, 0.0
        %v1261 = vmax.f32 %v1081, 0.0
        %v1262 = vmax.f32 %v1084, 0.0
        %v1263 = vmax.f32 %v1089, 0.0
        %v1264 = vmax.f32 %v1092, 0.0
        %v1265 = vmax.f32 %v1097, 0.0
        %v1266 = vmax.f32 %v1100, 0.0
        %v1267 = vmax.f32 %v1105, 0.0
        %v1268 = vmax.f32 %v1108, 0.0
        %v1269 = vmax.f32 %v1113, 0.0
        %v1270 = vmax.f32 %v1116, 0.0
        %v1271 = vmax.f32 %v1121, 0.0
        %v1272 = vmax.f32 %v1124, 0.0
        %v1273 = vmax.f32 %v1129, 0.0
        %v1274 = vmax.f32 %v1132, 0.0
        %v1275 = vmax.f32 %v1137, 0.0
        %v1276 = vmax.f32 %v1140, 0.0
        %v1277 = vmax.f32 %v1145, 0.0
        %v1278 = vmax.f32 %v1148, 0.0
        %v1279 = vpack.c.bf16 %v1152, %v1151
        %v1280 = vpack.c.bf16 %v1154, %v1153
        %v1281 = vpack.c.bf16 %v1156, %v1155
        %v1282 = vpack.c.bf16 %v1158, %v1157
        %v1283 = vpack.c.bf16 %v1160, %v1159
        %v1284 = vpack.c.bf16 %v1162, %v1161
        %v1285 = vpack.c.bf16 %v1164, %v1163
        %v1286 = vpack.c.bf16 %v1166, %v1165
        %v1287 = vpack.c.bf16 %v1168, %v1167
        %v1288 = vpack.c.bf16 %v1170, %v1169
        %v1289 = vpack.c.bf16 %v1172, %v1171
        %v1290 = vpack.c.bf16 %v1174, %v1173
        %v1291 = vpack.c.bf16 %v1176, %v1175
        %v1292 = vpack.c.bf16 %v1178, %v1177
        %v1293 = vpack.c.bf16 %v1180, %v1179
        %v1294 = vpack.c.bf16 %v1182, %v1181
        %v1295 = vpack.c.bf16 %v1184, %v1183
        %v1296 = vpack.c.bf16 %v1186, %v1185
        %v1297 = vpack.c.bf16 %v1188, %v1187
        %v1298 = vpack.c.bf16 %v1190, %v1189
        %v1299 = vpack.c.bf16 %v1192, %v1191
        %v1300 = vpack.c.bf16 %v1194, %v1193
        %v1301 = vpack.c.bf16 %v1196, %v1195
        %v1302 = vpack.c.bf16 %v1198, %v1197
        %v1303 = vpack.c.bf16 %v1200, %v1199
        %v1304 = vpack.c.bf16 %v1202, %v1201
        %v1305 = vpack.c.bf16 %v1204, %v1203
        %v1306 = vpack.c.bf16 %v1206, %v1205
        %v1307 = vpack.c.bf16 %v1208, %v1207
        %v1308 = vpack.c.bf16 %v1210, %v1209
        %v1309 = vpack.c.bf16 %v1212, %v1211
        %v1310 = vpack.c.bf16 %v1214, %v1213
        %v1311 = vpack.c.bf16 %v1216, %v1215
        %v1312 = vpack.c.bf16 %v1218, %v1217
        %v1313 = vpack.c.bf16 %v1220, %v1219
        %v1314 = vpack.c.bf16 %v1222, %v1221
        %v1315 = vpack.c.bf16 %v1224, %v1223
        %v1316 = vpack.c.bf16 %v1226, %v1225
        %v1317 = vpack.c.bf16 %v1228, %v1227
        %v1318 = vpack.c.bf16 %v1230, %v1229
        %v1319 = vpack.c.bf16 %v1232, %v1231
        %v1320 = vpack.c.bf16 %v1234, %v1233
        %v1321 = vpack.c.bf16 %v1236, %v1235
        %v1322 = vpack.c.bf16 %v1238, %v1237
        %v1323 = vpack.c.bf16 %v1240, %v1239
        %v1324 = vpack.c.bf16 %v1242, %v1241
        %v1325 = vpack.c.bf16 %v1244, %v1243
        %v1326 = vpack.c.bf16 %v1246, %v1245
        %v1327 = vpack.c.bf16 %v1248, %v1247
        %v1328 = vpack.c.bf16 %v1250, %v1249
        %v1329 = vpack.c.bf16 %v1252, %v1251
        %v1330 = vpack.c.bf16 %v1254, %v1253
        %v1331 = vpack.c.bf16 %v1256, %v1255
        %v1332 = vpack.c.bf16 %v1258, %v1257
        %v1333 = vpack.c.bf16 %v1260, %v1259
        %v1334 = vpack.c.bf16 %v1262, %v1261
        %v1335 = vpack.c.bf16 %v1264, %v1263
        %v1336 = vpack.c.bf16 %v1266, %v1265
        %v1337 = vpack.c.bf16 %v1268, %v1267
        %v1338 = vpack.c.bf16 %v1270, %v1269
        %v1339 = vpack.c.bf16 %v1272, %v1271
        %v1340 = vpack.c.bf16 %v1274, %v1273
        %v1341 = vpack.c.bf16 %v1276, %v1275
        %v1342 = vpack.c.bf16 %v1278, %v1277
        %v1343 = vld [vmem:[%s2] sm:$0xf]
        %v1344 = vld [vmem:[%s2 + $0x4] sm:$0xf]
        %v1345 = vld [vmem:[%s2 + $0x8] sm:$0xf]
        %v1346 = vld [vmem:[%s2 + $0xc] sm:$0xf]
        %v1347 = vld [vmem:[%s2 + $0x10] sm:$0xf]
        %v1348 = vld [vmem:[%s2 + $0x14] sm:$0xf]
        %v1349 = vld [vmem:[%s2 + $0x18] sm:$0xf]
        %v1350 = vld [vmem:[%s2 + $0x1c] sm:$0xf]
        %v1351 = vld [vmem:[%s2 + $0x20] sm:$0xf]
        %v1352 = vld [vmem:[%s2 + $0x24] sm:$0xf]
        %v1353 = vld [vmem:[%s2 + $0x28] sm:$0xf]
        %v1354 = vld [vmem:[%s2 + $0x2c] sm:$0xf]
        %v1355 = vld [vmem:[%s2 + $0x30] sm:$0xf]
        %v1356 = vld [vmem:[%s2 + $0x34] sm:$0xf]
        %v1357 = vld [vmem:[%s2 + $0x38] sm:$0xf]
        %v1358 = vld [vmem:[%s2 + $0x3c] sm:$0xf]
        %v1359 = vld [vmem:[%s3 + $0x1] sm:$0x1]
        %v1360 = vlaneseq
        %v1361 = vshrl.u32 %v1360, 7
        %v1362 = vsub.s32 0, %v1361
        %v1363 = vrot.slane %v1359, %v1362
        %v1380 = vunpack.c.l.b16 %v1343
        %v1381 = vunpack.c.l.b16 %v1344
        %v1382 = vunpack.c.l.b16 %v1345
        %v1383 = vunpack.c.l.b16 %v1346
        %v1384 = vunpack.c.l.b16 %v1347
        %v1385 = vunpack.c.l.b16 %v1348
        %v1386 = vunpack.c.l.b16 %v1349
        %v1387 = vunpack.c.l.b16 %v1350
        %v1388 = vunpack.c.l.b16 %v1351
        %v1389 = vunpack.c.l.b16 %v1352
        %v1390 = vunpack.c.l.b16 %v1353
        %v1391 = vunpack.c.l.b16 %v1354
        %v1392 = vunpack.c.l.b16 %v1355
        %v1393 = vunpack.c.l.b16 %v1356
        %v1394 = vunpack.c.l.b16 %v1357
        %v1395 = vunpack.c.l.b16 %v1358
        %v1396 = vpack.c.b16 %v1381, %v1380
        %v1397 = vpack.c.b16 %v1383, %v1382
        %v1398 = vpack.c.b16 %v1385, %v1384
        %v1399 = vpack.c.b16 %v1387, %v1386
        %v1400 = vpack.c.b16 %v1389, %v1388
        %v1401 = vpack.c.b16 %v1391, %v1390
        %v1402 = vpack.c.b16 %v1393, %v1392
        %v1403 = vpack.c.b16 %v1395, %v1394
        %1412 = vmatprep.subr.bf16.mxu0 0
        %1413 = vmatpush1.bf16.msra.mxu0 %v1396
        %1414 = vmatprep.subr.bf16.mxu0 0
        %1415 = vmatpush1.bf16.msra.mxu0 %v1397
        %1416 = vmatprep.subr.bf16.mxu0 0
        %1417 = vmatpush1.bf16.msra.mxu0 %v1398
        %1418 = vmatprep.subr.bf16.mxu0 0
        %1419 = vmatpush1.bf16.msra.mxu0 %v1399
        %1420 = vmatprep.subr.bf16.mxu0 0
        %1421 = vmatpush1.bf16.msra.mxu0 %v1400
        %1422 = vmatprep.subr.bf16.mxu0 0
        %1423 = vmatpush1.bf16.msra.mxu0 %v1401
        %1424 = vmatprep.subr.bf16.mxu0 0
        %1425 = vmatpush1.bf16.msra.mxu0 %v1402
        %1426 = vmatprep.subr.bf16.mxu0 0
        %1427 = vmatpush1.bf16.msra.mxu0 %v1403
        %1428 = vmatprep.subr.bf16.mxu0 0
        %1429 = vmatpush1.bf16.msra.mxu0 0
        %1430 = vmatprep.subr.bf16.mxu0 0
        %1431 = vmatpush1.bf16.msra.mxu0 0
        %1432 = vmatprep.subr.bf16.mxu0 0
        %1433 = vmatpush1.bf16.msra.mxu0 0
        %1434 = vmatprep.subr.bf16.mxu0 0
        %1435 = vmatpush1.bf16.msra.mxu0 0
        %1436 = vmatprep.subr.bf16.mxu0 0
        %1437 = vmatpush1.bf16.msra.mxu0 0
        %1438 = vmatprep.subr.bf16.mxu0 0
        %1439 = vmatpush1.bf16.msra.mxu0 0
        %1440 = vmatprep.subr.bf16.mxu0 0
        %1441 = vmatpush1.bf16.msra.mxu0 0
        %1442 = vmatprep.subr.bf16.mxu0 0
        %1443 = vmatpush1.bf16.msra.mxu0 0
        %1444 = vmatprep.mubr.bf16.mxu0 0
        %1445 = vmatmul.mubr.bf16.gmra.mrb[0].mxu0 %v1279
        %v1446 = vpop.f32.mrb[0].mxu0
        %v1447 = vadd.f32 %v1363, %v1446
        %v1448 = vpop.f32.mrb[0].mxu0
        %v1449 = vpop.f32.mrb[0].mxu0
        %v1450 = vadd.f32 %v1363, %v1449
        %v1451 = vpop.f32.mrb[0].mxu0
        %1452 = vmatprep.mubr.bf16.mxu0 0
        %1453 = vmatmul.mubr.bf16.gmra.mrb[0].mxu0 %v1280
        %v1454 = vpop.f32.mrb[0].mxu0
        %v1455 = vadd.f32 %v1363, %v1454
        %v1456 = vpop.f32.mrb[0].mxu0
        %v1457 = vpop.f32.mrb[0].mxu0
        %v1458 = vadd.f32 %v1363, %v1457
        %v1459 = vpop.f32.mrb[0].mxu0
        %1460 = vmatprep.mubr.bf16.mxu0 0
        %1461 = vmatmul.mubr.bf16.gmra.mrb[0].mxu0 %v1281
        %v1462 = vpop.f32.mrb[0].mxu0
        %v1463 = vadd.f32 %v1363, %v1462
        %v1464 = vpop.f32.mrb[0].mxu0
        %v1465 = vpop.f32.mrb[0].mxu0
        %v1466 = vadd.f32 %v1363, %v1465
        %v1467 = vpop.f32.mrb[0].mxu0
        %1468 = vmatprep.mubr.bf16.mxu0 0
        %1469 = vmatmul.mubr.bf16.gmra.mrb[0].mxu0 %v1282
        %v1470 = vpop.f32.mrb[0].mxu0
        %v1471 = vadd.f32 %v1363, %v1470
        %v1472 = vpop.f32.mrb[0].mxu0
        %v1473 = vpop.f32.mrb[0].mxu0
        %v1474 = vadd.f32 %v1363, %v1473
        %v1475 = vpop.f32.mrb[0].mxu0
        %1476 = vmatprep.mubr.bf16.mxu0 0
        %1477 = vmatmul.mubr.bf16.gmra.mrb[0].mxu0 %v1283
        %v1478 = vpop.f32.mrb[0].mxu0
        %v1479 = vadd.f32 %v1363, %v1478
        %v1480 = vpop.f32.mrb[0].mxu0
        %v1481 = vpop.f32.mrb[0].mxu0
        %v1482 = vadd.f32 %v1363, %v1481
        %v1483 = vpop.f32.mrb[0].mxu0
        %1484 = vmatprep.mubr.bf16.mxu0 0
        %1485 = vmatmul.mubr.bf16.gmra.mrb[0].mxu0 %v1284
        %v1486 = vpop.f32.mrb[0].mxu0
        %v1487 = vadd.f32 %v1363, %v1486
        %v1488 = vpop.f32.mrb[0].mxu0
        %v1489 = vpop.f32.mrb[0].mxu0
        %v1490 = vadd.f32 %v1363, %v1489
        %v1491 = vpop.f32.mrb[0].mxu0
        %1492 = vmatprep.mubr.bf16.mxu0 0
        %1493 = vmatmul.mubr.bf16.gmra.mrb[0].mxu0 %v1285
        %v1494 = vpop.f32.mrb[0].mxu0
        %v1495 = vadd.f32 %v1363, %v1494
        %v1496 = vpop.f32.mrb[0].mxu0
        %v1497 = vpop.f32.mrb[0].mxu0
        %v1498 = vadd.f32 %v1363, %v1497
        %v1499 = vpop.f32.mrb[0].mxu0
        %1500 = vmatprep.mubr.bf16.mxu0 0
        %1501 = vmatmul.mubr.bf16.gmra.mrb[0].mxu0 %v1286
        %v1502 = vpop.f32.mrb[0].mxu0
        %v1503 = vadd.f32 %v1363, %v1502
        %v1504 = vpop.f32.mrb[0].mxu0
        %v1505 = vpop.f32.mrb[0].mxu0
        %v1506 = vadd.f32 %v1363, %v1505
        %v1507 = vpop.f32.mrb[0].mxu0
        %1508 = vmatprep.mubr.bf16.mxu0 0
        %1509 = vmatmul.mubr.bf16.gmra.mrb[0].mxu0 %v1287
        %v1510 = vpop.f32.mrb[0].mxu0
        %v1511 = vadd.f32 %v1363, %v1510
        %v1512 = vpop.f32.mrb[0].mxu0
        %v1513 = vpop.f32.mrb[0].mxu0
        %v1514 = vadd.f32 %v1363, %v1513
        %v1515 = vpop.f32.mrb[0].mxu0
        %1516 = vmatprep.mubr.bf16.mxu0 0
        %1517 = vmatmul.mubr.bf16.gmra.mrb[0].mxu0 %v1288
        %v1518 = vpop.f32.mrb[0].mxu0
        %v1519 = vadd.f32 %v1363, %v1518
        %v1520 = vpop.f32.mrb[0].mxu0
        %v1521 = vpop.f32.mrb[0].mxu0
        %v1522 = vadd.f32 %v1363, %v1521
        %v1523 = vpop.f32.mrb[0].mxu0
        %1524 = vmatprep.mubr.bf16.mxu0 0
        %1525 = vmatmul.mubr.bf16.gmra.mrb[0].mxu0 %v1289
        %v1526 = vpop.f32.mrb[0].mxu0
        %v1527 = vadd.f32 %v1363, %v1526
        %v1528 = vpop.f32.mrb[0].mxu0
        %v1529 = vpop.f32.mrb[0].mxu0
        %v1530 = vadd.f32 %v1363, %v1529
        %v1531 = vpop.f32.mrb[0].mxu0
        %1532 = vmatprep.mubr.bf16.mxu0 0
        %1533 = vmatmul.mubr.bf16.gmra.mrb[0].mxu0 %v1290
        %v1534 = vpop.f32.mrb[0].mxu0
        %v1535 = vadd.f32 %v1363, %v1534
        %v1536 = vpop.f32.mrb[0].mxu0
        %v1537 = vpop.f32.mrb[0].mxu0
        %v1538 = vadd.f32 %v1363, %v1537
        %v1539 = vpop.f32.mrb[0].mxu0
        %1540 = vmatprep.mubr.bf16.mxu0 0
        %1541 = vmatmul.mubr.bf16.gmra.mrb[0].mxu0 %v1291
        %v1542 = vpop.f32.mrb[0].mxu0
        %v1543 = vadd.f32 %v1363, %v1542
        %v1544 = vpop.f32.mrb[0].mxu0
        %v1545 = vpop.f32.mrb[0].mxu0
        %v1546 = vadd.f32 %v1363, %v1545
        %v1547 = vpop.f32.mrb[0].mxu0
        %1548 = vmatprep.mubr.bf16.mxu0 0
        %1549 = vmatmul.mubr.bf16.gmra.mrb[0].mxu0 %v1292
        %v1550 = vpop.f32.mrb[0].mxu0
        %v1551 = vadd.f32 %v1363, %v1550
        %v1552 = vpop.f32.mrb[0].mxu0
        %v1553 = vpop.f32.mrb[0].mxu0
        %v1554 = vadd.f32 %v1363, %v1553
        %v1555 = vpop.f32.mrb[0].mxu0
        %1556 = vmatprep.mubr.bf16.mxu0 0
        %1557 = vmatmul.mubr.bf16.gmra.mrb[0].mxu0 %v1293
        %v1558 = vpop.f32.mrb[0].mxu0
        %v1559 = vadd.f32 %v1363, %v1558
        %v1560 = vpop.f32.mrb[0].mxu0
        %v1561 = vpop.f32.mrb[0].mxu0
        %v1562 = vadd.f32 %v1363, %v1561
        %v1563 = vpop.f32.mrb[0].mxu0
        %1564 = vmatprep.mubr.bf16.mxu0 0
        %1565 = vmatmul.mubr.bf16.gmra.mrb[0].mxu0 %v1294
        %v1566 = vpop.f32.mrb[0].mxu0
        %v1567 = vadd.f32 %v1363, %v1566
        %v1568 = vpop.f32.mrb[0].mxu0
        %v1569 = vpop.f32.mrb[0].mxu0
        %v1570 = vadd.f32 %v1363, %v1569
        %v1571 = vpop.f32.mrb[0].mxu0
        %1572 = vmatprep.mubr.bf16.mxu0 0
        %1573 = vmatmul.mubr.bf16.gmra.mrb[0].mxu0 %v1295
        %v1574 = vpop.f32.mrb[0].mxu0
        %v1575 = vadd.f32 %v1363, %v1574
        %v1576 = vpop.f32.mrb[0].mxu0
        %v1577 = vpop.f32.mrb[0].mxu0
        %v1578 = vadd.f32 %v1363, %v1577
        %v1579 = vpop.f32.mrb[0].mxu0
        %1580 = vmatprep.mubr.bf16.mxu0 0
        %1581 = vmatmul.mubr.bf16.gmra.mrb[0].mxu0 %v1296
        %v1582 = vpop.f32.mrb[0].mxu0
        %v1583 = vadd.f32 %v1363, %v1582
        %v1584 = vpop.f32.mrb[0].mxu0
        %v1585 = vpop.f32.mrb[0].mxu0
        %v1586 = vadd.f32 %v1363, %v1585
        %v1587 = vpop.f32.mrb[0].mxu0
        %1588 = vmatprep.mubr.bf16.mxu0 0
        %1589 = vmatmul.mubr.bf16.gmra.mrb[0].mxu0 %v1297
        %v1590 = vpop.f32.mrb[0].mxu0
        %v1591 = vadd.f32 %v1363, %v1590
        %v1592 = vpop.f32.mrb[0].mxu0
        %v1593 = vpop.f32.mrb[0].mxu0
        %v1594 = vadd.f32 %v1363, %v1593
        %v1595 = vpop.f32.mrb[0].mxu0
        %1596 = vmatprep.mubr.bf16.mxu0 0
        %1597 = vmatmul.mubr.bf16.gmra.mrb[0].mxu0 %v1298
        %v1598 = vpop.f32.mrb[0].mxu0
        %v1599 = vadd.f32 %v1363, %v1598
        %v1600 = vpop.f32.mrb[0].mxu0
        %v1601 = vpop.f32.mrb[0].mxu0
        %v1602 = vadd.f32 %v1363, %v1601
        %v1603 = vpop.f32.mrb[0].mxu0
        %1604 = vmatprep.mubr.bf16.mxu0 0
        %1605 = vmatmul.mubr.bf16.gmra.mrb[0].mxu0 %v1299
        %v1606 = vpop.f32.mrb[0].mxu0
        %v1607 = vadd.f32 %v1363, %v1606
        %v1608 = vpop.f32.mrb[0].mxu0
        %v1609 = vpop.f32.mrb[0].mxu0
        %v1610 = vadd.f32 %v1363, %v1609
        %v1611 = vpop.f32.mrb[0].mxu0
        %1612 = vmatprep.mubr.bf16.mxu0 0
        %1613 = vmatmul.mubr.bf16.gmra.mrb[0].mxu0 %v1300
        %v1614 = vpop.f32.mrb[0].mxu0
        %v1615 = vadd.f32 %v1363, %v1614
        %v1616 = vpop.f32.mrb[0].mxu0
        %v1617 = vpop.f32.mrb[0].mxu0
        %v1618 = vadd.f32 %v1363, %v1617
        %v1619 = vpop.f32.mrb[0].mxu0
        %1620 = vmatprep.mubr.bf16.mxu0 0
        %1621 = vmatmul.mubr.bf16.gmra.mrb[0].mxu0 %v1301
        %v1622 = vpop.f32.mrb[0].mxu0
        %v1623 = vadd.f32 %v1363, %v1622
        %v1624 = vpop.f32.mrb[0].mxu0
        %v1625 = vpop.f32.mrb[0].mxu0
        %v1626 = vadd.f32 %v1363, %v1625
        %v1627 = vpop.f32.mrb[0].mxu0
        %1628 = vmatprep.mubr.bf16.mxu0 0
        %1629 = vmatmul.mubr.bf16.gmra.mrb[0].mxu0 %v1302
        %v1630 = vpop.f32.mrb[0].mxu0
        %v1631 = vadd.f32 %v1363, %v1630
        %v1632 = vpop.f32.mrb[0].mxu0
        %v1633 = vpop.f32.mrb[0].mxu0
        %v1634 = vadd.f32 %v1363, %v1633
        %v1635 = vpop.f32.mrb[0].mxu0
        %1636 = vmatprep.mubr.bf16.mxu0 0
        %1637 = vmatmul.mubr.bf16.gmra.mrb[0].mxu0 %v1303
        %v1638 = vpop.f32.mrb[0].mxu0
        %v1639 = vadd.f32 %v1363, %v1638
        %v1640 = vpop.f32.mrb[0].mxu0
        %v1641 = vpop.f32.mrb[0].mxu0
        %v1642 = vadd.f32 %v1363, %v1641
        %v1643 = vpop.f32.mrb[0].mxu0
        %1644 = vmatprep.mubr.bf16.mxu0 0
        %1645 = vmatmul.mubr.bf16.gmra.mrb[0].mxu0 %v1304
        %v1646 = vpop.f32.mrb[0].mxu0
        %v1647 = vadd.f32 %v1363, %v1646
        %v1648 = vpop.f32.mrb[0].mxu0
        %v1649 = vpop.f32.mrb[0].mxu0
        %v1650 = vadd.f32 %v1363, %v1649
        %v1651 = vpop.f32.mrb[0].mxu0
        %1652 = vmatprep.mubr.bf16.mxu0 0
        %1653 = vmatmul.mubr.bf16.gmra.mrb[0].mxu0 %v1305
        %v1654 = vpop.f32.mrb[0].mxu0
        %v1655 = vadd.f32 %v1363, %v1654
        %v1656 = vpop.f32.mrb[0].mxu0
        %v1657 = vpop.f32.mrb[0].mxu0
        %v1658 = vadd.f32 %v1363, %v1657
        %v1659 = vpop.f32.mrb[0].mxu0
        %1660 = vmatprep.mubr.bf16.mxu0 0
        %1661 = vmatmul.mubr.bf16.gmra.mrb[0].mxu0 %v1306
        %v1662 = vpop.f32.mrb[0].mxu0
        %v1663 = vadd.f32 %v1363, %v1662
        %v1664 = vpop.f32.mrb[0].mxu0
        %v1665 = vpop.f32.mrb[0].mxu0
        %v1666 = vadd.f32 %v1363, %v1665
        %v1667 = vpop.f32.mrb[0].mxu0
        %1668 = vmatprep.mubr.bf16.mxu0 0
        %1669 = vmatmul.mubr.bf16.gmra.mrb[0].mxu0 %v1307
        %v1670 = vpop.f32.mrb[0].mxu0
        %v1671 = vadd.f32 %v1363, %v1670
        %v1672 = vpop.f32.mrb[0].mxu0
        %v1673 = vpop.f32.mrb[0].mxu0
        %v1674 = vadd.f32 %v1363, %v1673
        %v1675 = vpop.f32.mrb[0].mxu0
        %1676 = vmatprep.mubr.bf16.mxu0 0
        %1677 = vmatmul.mubr.bf16.gmra.mrb[0].mxu0 %v1308
        %v1678 = vpop.f32.mrb[0].mxu0
        %v1679 = vadd.f32 %v1363, %v1678
        %v1680 = vpop.f32.mrb[0].mxu0
        %v1681 = vpop.f32.mrb[0].mxu0
        %v1682 = vadd.f32 %v1363, %v1681
        %v1683 = vpop.f32.mrb[0].mxu0
        %1684 = vmatprep.mubr.bf16.mxu0 0
        %1685 = vmatmul.mubr.bf16.gmra.mrb[0].mxu0 %v1309
        %v1686 = vpop.f32.mrb[0].mxu0
        %v1687 = vadd.f32 %v1363, %v1686
        %v1688 = vpop.f32.mrb[0].mxu0
        %v1689 = vpop.f32.mrb[0].mxu0
        %v1690 = vadd.f32 %v1363, %v1689
        %v1691 = vpop.f32.mrb[0].mxu0
        %1692 = vmatprep.mubr.bf16.mxu0 0
        %1693 = vmatmul.mubr.bf16.gmra.mrb[0].mxu0 %v1310
        %v1694 = vpop.f32.mrb[0].mxu0
        %v1695 = vadd.f32 %v1363, %v1694
        %v1696 = vpop.f32.mrb[0].mxu0
        %v1697 = vpop.f32.mrb[0].mxu0
        %v1698 = vadd.f32 %v1363, %v1697
        %v1699 = vpop.f32.mrb[0].mxu0
        %1700 = vmatprep.mubr.bf16.mxu0 0
        %1701 = vmatmul.mubr.bf16.gmra.mrb[0].mxu0 %v1311
        %v1702 = vpop.f32.mrb[0].mxu0
        %v1703 = vadd.f32 %v1363, %v1702
        %v1704 = vpop.f32.mrb[0].mxu0
        %v1705 = vpop.f32.mrb[0].mxu0
        %v1706 = vadd.f32 %v1363, %v1705
        %v1707 = vpop.f32.mrb[0].mxu0
        %1708 = vmatprep.mubr.bf16.mxu0 0
        %1709 = vmatmul.mubr.bf16.gmra.mrb[0].mxu0 %v1312
        %v1710 = vpop.f32.mrb[0].mxu0
        %v1711 = vadd.f32 %v1363, %v1710
        %v1712 = vpop.f32.mrb[0].mxu0
        %v1713 = vpop.f32.mrb[0].mxu0
        %v1714 = vadd.f32 %v1363, %v1713
        %v1715 = vpop.f32.mrb[0].mxu0
        %1716 = vmatprep.mubr.bf16.mxu0 0
        %1717 = vmatmul.mubr.bf16.gmra.mrb[0].mxu0 %v1313
        %v1718 = vpop.f32.mrb[0].mxu0
        %v1719 = vadd.f32 %v1363, %v1718
        %v1720 = vpop.f32.mrb[0].mxu0
        %v1721 = vpop.f32.mrb[0].mxu0
        %v1722 = vadd.f32 %v1363, %v1721
        %v1723 = vpop.f32.mrb[0].mxu0
        %1724 = vmatprep.mubr.bf16.mxu0 0
        %1725 = vmatmul.mubr.bf16.gmra.mrb[0].mxu0 %v1314
        %v1726 = vpop.f32.mrb[0].mxu0
        %v1727 = vadd.f32 %v1363, %v1726
        %v1728 = vpop.f32.mrb[0].mxu0
        %v1729 = vpop.f32.mrb[0].mxu0
        %v1730 = vadd.f32 %v1363, %v1729
        %v1731 = vpop.f32.mrb[0].mxu0
        %1732 = vmatprep.mubr.bf16.mxu0 0
        %1733 = vmatmul.mubr.bf16.gmra.mrb[0].mxu0 %v1315
        %v1734 = vpop.f32.mrb[0].mxu0
        %v1735 = vadd.f32 %v1363, %v1734
        %v1736 = vpop.f32.mrb[0].mxu0
        %v1737 = vpop.f32.mrb[0].mxu0
        %v1738 = vadd.f32 %v1363, %v1737
        %v1739 = vpop.f32.mrb[0].mxu0
        %1740 = vmatprep.mubr.bf16.mxu0 0
        %1741 = vmatmul.mubr.bf16.gmra.mrb[0].mxu0 %v1316
        %v1742 = vpop.f32.mrb[0].mxu0
        %v1743 = vadd.f32 %v1363, %v1742
        %v1744 = vpop.f32.mrb[0].mxu0
        %v1745 = vpop.f32.mrb[0].mxu0
        %v1746 = vadd.f32 %v1363, %v1745
        %v1747 = vpop.f32.mrb[0].mxu0
        %1748 = vmatprep.mubr.bf16.mxu0 0
        %1749 = vmatmul.mubr.bf16.gmra.mrb[0].mxu0 %v1317
        %v1750 = vpop.f32.mrb[0].mxu0
        %v1751 = vadd.f32 %v1363, %v1750
        %v1752 = vpop.f32.mrb[0].mxu0
        %v1753 = vpop.f32.mrb[0].mxu0
        %v1754 = vadd.f32 %v1363, %v1753
        %v1755 = vpop.f32.mrb[0].mxu0
        %1756 = vmatprep.mubr.bf16.mxu0 0
        %1757 = vmatmul.mubr.bf16.gmra.mrb[0].mxu0 %v1318
        %v1758 = vpop.f32.mrb[0].mxu0
        %v1759 = vadd.f32 %v1363, %v1758
        %v1760 = vpop.f32.mrb[0].mxu0
        %v1761 = vpop.f32.mrb[0].mxu0
        %v1762 = vadd.f32 %v1363, %v1761
        %v1763 = vpop.f32.mrb[0].mxu0
        %1764 = vmatprep.mubr.bf16.mxu0 0
        %1765 = vmatmul.mubr.bf16.gmra.mrb[0].mxu0 %v1319
        %v1766 = vpop.f32.mrb[0].mxu0
        %v1767 = vadd.f32 %v1363, %v1766
        %v1768 = vpop.f32.mrb[0].mxu0
        %v1769 = vpop.f32.mrb[0].mxu0
        %v1770 = vadd.f32 %v1363, %v1769
        %v1771 = vpop.f32.mrb[0].mxu0
        %1772 = vmatprep.mubr.bf16.mxu0 0
        %1773 = vmatmul.mubr.bf16.gmra.mrb[0].mxu0 %v1320
        %v1774 = vpop.f32.mrb[0].mxu0
        %v1775 = vadd.f32 %v1363, %v1774
        %v1776 = vpop.f32.mrb[0].mxu0
        %v1777 = vpop.f32.mrb[0].mxu0
        %v1778 = vadd.f32 %v1363, %v1777
        %v1779 = vpop.f32.mrb[0].mxu0
        %1780 = vmatprep.mubr.bf16.mxu0 0
        %1781 = vmatmul.mubr.bf16.gmra.mrb[0].mxu0 %v1321
        %v1782 = vpop.f32.mrb[0].mxu0
        %v1783 = vadd.f32 %v1363, %v1782
        %v1784 = vpop.f32.mrb[0].mxu0
        %v1785 = vpop.f32.mrb[0].mxu0
        %v1786 = vadd.f32 %v1363, %v1785
        %v1787 = vpop.f32.mrb[0].mxu0
        %1788 = vmatprep.mubr.bf16.mxu0 0
        %1789 = vmatmul.mubr.bf16.gmra.mrb[0].mxu0 %v1322
        %v1790 = vpop.f32.mrb[0].mxu0
        %v1791 = vadd.f32 %v1363, %v1790
        %v1792 = vpop.f32.mrb[0].mxu0
        %v1793 = vpop.f32.mrb[0].mxu0
        %v1794 = vadd.f32 %v1363, %v1793
        %v1795 = vpop.f32.mrb[0].mxu0
        %1796 = vmatprep.mubr.bf16.mxu0 0
        %1797 = vmatmul.mubr.bf16.gmra.mrb[0].mxu0 %v1323
        %v1798 = vpop.f32.mrb[0].mxu0
        %v1799 = vadd.f32 %v1363, %v1798
        %v1800 = vpop.f32.mrb[0].mxu0
        %v1801 = vpop.f32.mrb[0].mxu0
        %v1802 = vadd.f32 %v1363, %v1801
        %v1803 = vpop.f32.mrb[0].mxu0
        %1804 = vmatprep.mubr.bf16.mxu0 0
        %1805 = vmatmul.mubr.bf16.gmra.mrb[0].mxu0 %v1324
        %v1806 = vpop.f32.mrb[0].mxu0
        %v1807 = vadd.f32 %v1363, %v1806
        %v1808 = vpop.f32.mrb[0].mxu0
        %v1809 = vpop.f32.mrb[0].mxu0
        %v1810 = vadd.f32 %v1363, %v1809
        %v1811 = vpop.f32.mrb[0].mxu0
        %1812 = vmatprep.mubr.bf16.mxu0 0
        %1813 = vmatmul.mubr.bf16.gmra.mrb[0].mxu0 %v1325
        %v1814 = vpop.f32.mrb[0].mxu0
        %v1815 = vadd.f32 %v1363, %v1814
        %v1816 = vpop.f32.mrb[0].mxu0
        %v1817 = vpop.f32.mrb[0].mxu0
        %v1818 = vadd.f32 %v1363, %v1817
        %v1819 = vpop.f32.mrb[0].mxu0
        %1820 = vmatprep.mubr.bf16.mxu0 0
        %1821 = vmatmul.mubr.bf16.gmra.mrb[0].mxu0 %v1326
        %v1822 = vpop.f32.mrb[0].mxu0
        %v1823 = vadd.f32 %v1363, %v1822
        %v1824 = vpop.f32.mrb[0].mxu0
        %v1825 = vpop.f32.mrb[0].mxu0
        %v1826 = vadd.f32 %v1363, %v1825
        %v1827 = vpop.f32.mrb[0].mxu0
        %1828 = vmatprep.mubr.bf16.mxu0 0
        %1829 = vmatmul.mubr.bf16.gmra.mrb[0].mxu0 %v1327
        %v1830 = vpop.f32.mrb[0].mxu0
        %v1831 = vadd.f32 %v1363, %v1830
        %v1832 = vpop.f32.mrb[0].mxu0
        %v1833 = vpop.f32.mrb[0].mxu0
        %v1834 = vadd.f32 %v1363, %v1833
        %v1835 = vpop.f32.mrb[0].mxu0
        %1836 = vmatprep.mubr.bf16.mxu0 0
        %1837 = vmatmul.mubr.bf16.gmra.mrb[0].mxu0 %v1328
        %v1838 = vpop.f32.mrb[0].mxu0
        %v1839 = vadd.f32 %v1363, %v1838
        %v1840 = vpop.f32.mrb[0].mxu0
        %v1841 = vpop.f32.mrb[0].mxu0
        %v1842 = vadd.f32 %v1363, %v1841
        %v1843 = vpop.f32.mrb[0].mxu0
        %1844 = vmatprep.mubr.bf16.mxu0 0
        %1845 = vmatmul.mubr.bf16.gmra.mrb[0].mxu0 %v1329
        %v1846 = vpop.f32.mrb[0].mxu0
        %v1847 = vadd.f32 %v1363, %v1846
        %v1848 = vpop.f32.mrb[0].mxu0
        %v1849 = vpop.f32.mrb[0].mxu0
        %v1850 = vadd.f32 %v1363, %v1849
        %v1851 = vpop.f32.mrb[0].mxu0
        %1852 = vmatprep.mubr.bf16.mxu0 0
        %1853 = vmatmul.mubr.bf16.gmra.mrb[0].mxu0 %v1330
        %v1854 = vpop.f32.mrb[0].mxu0
        %v1855 = vadd.f32 %v1363, %v1854
        %v1856 = vpop.f32.mrb[0].mxu0
        %v1857 = vpop.f32.mrb[0].mxu0
        %v1858 = vadd.f32 %v1363, %v1857
        %v1859 = vpop.f32.mrb[0].mxu0
        %1860 = vmatprep.mubr.bf16.mxu0 0
        %1861 = vmatmul.mubr.bf16.gmra.mrb[0].mxu0 %v1331
        %v1862 = vpop.f32.mrb[0].mxu0
        %v1863 = vadd.f32 %v1363, %v1862
        %v1864 = vpop.f32.mrb[0].mxu0
        %v1865 = vpop.f32.mrb[0].mxu0
        %v1866 = vadd.f32 %v1363, %v1865
        %v1867 = vpop.f32.mrb[0].mxu0
        %1868 = vmatprep.mubr.bf16.mxu0 0
        %1869 = vmatmul.mubr.bf16.gmra.mrb[0].mxu0 %v1332
        %v1870 = vpop.f32.mrb[0].mxu0
        %v1871 = vadd.f32 %v1363, %v1870
        %v1872 = vpop.f32.mrb[0].mxu0
        %v1873 = vpop.f32.mrb[0].mxu0
        %v1874 = vadd.f32 %v1363, %v1873
        %v1875 = vpop.f32.mrb[0].mxu0
        %1876 = vmatprep.mubr.bf16.mxu0 0
        %1877 = vmatmul.mubr.bf16.gmra.mrb[0].mxu0 %v1333
        %v1878 = vpop.f32.mrb[0].mxu0
        %v1879 = vadd.f32 %v1363, %v1878
        %v1880 = vpop.f32.mrb[0].mxu0
        %v1881 = vpop.f32.mrb[0].mxu0
        %v1882 = vadd.f32 %v1363, %v1881
        %v1883 = vpop.f32.mrb[0].mxu0
        %1884 = vmatprep.mubr.bf16.mxu0 0
        %1885 = vmatmul.mubr.bf16.gmra.mrb[0].mxu0 %v1334
        %v1886 = vpop.f32.mrb[0].mxu0
        %v1887 = vadd.f32 %v1363, %v1886
        %v1888 = vpop.f32.mrb[0].mxu0
        %v1889 = vpop.f32.mrb[0].mxu0
        %v1890 = vadd.f32 %v1363, %v1889
        %v1891 = vpop.f32.mrb[0].mxu0
        %1892 = vmatprep.mubr.bf16.mxu0 0
        %1893 = vmatmul.mubr.bf16.gmra.mrb[0].mxu0 %v1335
        %v1894 = vpop.f32.mrb[0].mxu0
        %v1895 = vadd.f32 %v1363, %v1894
        %v1896 = vpop.f32.mrb[0].mxu0
        %v1897 = vpop.f32.mrb[0].mxu0
        %v1898 = vadd.f32 %v1363, %v1897
        %v1899 = vpop.f32.mrb[0].mxu0
        %1900 = vmatprep.mubr.bf16.mxu0 0
        %1901 = vmatmul.mubr.bf16.gmra.mrb[0].mxu0 %v1336
        %v1902 = vpop.f32.mrb[0].mxu0
        %v1903 = vadd.f32 %v1363, %v1902
        %v1904 = vpop.f32.mrb[0].mxu0
        %v1905 = vpop.f32.mrb[0].mxu0
        %v1906 = vadd.f32 %v1363, %v1905
        %v1907 = vpop.f32.mrb[0].mxu0
        %1908 = vmatprep.mubr.bf16.mxu0 0
        %1909 = vmatmul.mubr.bf16.gmra.mrb[0].mxu0 %v1337
        %v1910 = vpop.f32.mrb[0].mxu0
        %v1911 = vadd.f32 %v1363, %v1910
        %v1912 = vpop.f32.mrb[0].mxu0
        %v1913 = vpop.f32.mrb[0].mxu0
        %v1914 = vadd.f32 %v1363, %v1913
        %v1915 = vpop.f32.mrb[0].mxu0
        %1916 = vmatprep.mubr.bf16.mxu0 0
        %1917 = vmatmul.mubr.bf16.gmra.mrb[0].mxu0 %v1338
        %v1918 = vpop.f32.mrb[0].mxu0
        %v1919 = vadd.f32 %v1363, %v1918
        %v1920 = vpop.f32.mrb[0].mxu0
        %v1921 = vpop.f32.mrb[0].mxu0
        %v1922 = vadd.f32 %v1363, %v1921
        %v1923 = vpop.f32.mrb[0].mxu0
        %1924 = vmatprep.mubr.bf16.mxu0 0
        %1925 = vmatmul.mubr.bf16.gmra.mrb[0].mxu0 %v1339
        %v1926 = vpop.f32.mrb[0].mxu0
        %v1927 = vadd.f32 %v1363, %v1926
        %v1928 = vpop.f32.mrb[0].mxu0
        %v1929 = vpop.f32.mrb[0].mxu0
        %v1930 = vadd.f32 %v1363, %v1929
        %v1931 = vpop.f32.mrb[0].mxu0
        %1932 = vmatprep.mubr.bf16.mxu0 0
        %1933 = vmatmul.mubr.bf16.gmra.mrb[0].mxu0 %v1340
        %v1934 = vpop.f32.mrb[0].mxu0
        %v1935 = vadd.f32 %v1363, %v1934
        %v1936 = vpop.f32.mrb[0].mxu0
        %v1937 = vpop.f32.mrb[0].mxu0
        %v1938 = vadd.f32 %v1363, %v1937
        %v1939 = vpop.f32.mrb[0].mxu0
        %1940 = vmatprep.mubr.bf16.mxu0 0
        %1941 = vmatmul.mubr.bf16.gmra.mrb[0].mxu0 %v1341
        %v1942 = vpop.f32.mrb[0].mxu0
        %v1943 = vadd.f32 %v1363, %v1942
        %v1944 = vpop.f32.mrb[0].mxu0
        %v1945 = vpop.f32.mrb[0].mxu0
        %v1946 = vadd.f32 %v1363, %v1945
        %v1947 = vpop.f32.mrb[0].mxu0
        %1948 = vmatprep.mubr.bf16.mxu0 0
        %1949 = vmatmul.mubr.bf16.gmra.mrb[0].mxu0 %v1342
        %v1950 = vpop.f32.mrb[0].mxu0
        %v1951 = vadd.f32 %v1363, %v1950
        %v1952 = vpop.f32.mrb[0].mxu0
        %v1953 = vpop.f32.mrb[0].mxu0
        %v1954 = vadd.f32 %v1363, %v1953
        %v1955 = vpop.f32.mrb[0].mxu0
        %1956 = vdwg.mxu0
        %v1957 = vmax.f32 %v1447, 0.0
        %v1958 = vmax.f32 %v1450, 0.0
        %v1959 = vmax.f32 %v1455, 0.0
        %v1960 = vmax.f32 %v1458, 0.0
        %v1961 = vmax.f32 %v1463, 0.0
        %v1962 = vmax.f32 %v1466, 0.0
        %v1963 = vmax.f32 %v1471, 0.0
        %v1964 = vmax.f32 %v1474, 0.0
        %v1965 = vmax.f32 %v1479, 0.0
        %v1966 = vmax.f32 %v1482, 0.0
        %v1967 = vmax.f32 %v1487, 0.0
        %v1968 = vmax.f32 %v1490, 0.0
        %v1969 = vmax.f32 %v1495, 0.0
        %v1970 = vmax.f32 %v1498, 0.0
        %v1971 = vmax.f32 %v1503, 0.0
        %v1972 = vmax.f32 %v1506, 0.0
        %v1973 = vmax.f32 %v1511, 0.0
        %v1974 = vmax.f32 %v1514, 0.0
        %v1975 = vmax.f32 %v1519, 0.0
        %v1976 = vmax.f32 %v1522, 0.0
        %v1977 = vmax.f32 %v1527, 0.0
        %v1978 = vmax.f32 %v1530, 0.0
        %v1979 = vmax.f32 %v1535, 0.0
        %v1980 = vmax.f32 %v1538, 0.0
        %v1981 = vmax.f32 %v1543, 0.0
        %v1982 = vmax.f32 %v1546, 0.0
        %v1983 = vmax.f32 %v1551, 0.0
        %v1984 = vmax.f32 %v1554, 0.0
        %v1985 = vmax.f32 %v1559, 0.0
        %v1986 = vmax.f32 %v1562, 0.0
        %v1987 = vmax.f32 %v1567, 0.0
        %v1988 = vmax.f32 %v1570, 0.0
        %v1989 = vmax.f32 %v1575, 0.0
        %v1990 = vmax.f32 %v1578, 0.0
        %v1991 = vmax.f32 %v1583, 0.0
        %v1992 = vmax.f32 %v1586, 0.0
        %v1993 = vmax.f32 %v1591, 0.0
        %v1994 = vmax.f32 %v1594, 0.0
        %v1995 = vmax.f32 %v1599, 0.0
        %v1996 = vmax.f32 %v1602, 0.0
        %v1997 = vmax.f32 %v1607, 0.0
        %v1998 = vmax.f32 %v1610, 0.0
        %v1999 = vmax.f32 %v1615, 0.0
        %v2000 = vmax.f32 %v1618, 0.0
        %v2001 = vmax.f32 %v1623, 0.0
        %v2002 = vmax.f32 %v1626, 0.0
        %v2003 = vmax.f32 %v1631, 0.0
        %v2004 = vmax.f32 %v1634, 0.0
        %v2005 = vmax.f32 %v1639, 0.0
        %v2006 = vmax.f32 %v1642, 0.0
        %v2007 = vmax.f32 %v1647, 0.0
        %v2008 = vmax.f32 %v1650, 0.0
        %v2009 = vmax.f32 %v1655, 0.0
        %v2010 = vmax.f32 %v1658, 0.0
        %v2011 = vmax.f32 %v1663, 0.0
        %v2012 = vmax.f32 %v1666, 0.0
        %v2013 = vmax.f32 %v1671, 0.0
        %v2014 = vmax.f32 %v1674, 0.0
        %v2015 = vmax.f32 %v1679, 0.0
        %v2016 = vmax.f32 %v1682, 0.0
        %v2017 = vmax.f32 %v1687, 0.0
        %v2018 = vmax.f32 %v1690, 0.0
        %v2019 = vmax.f32 %v1695, 0.0
        %v2020 = vmax.f32 %v1698, 0.0
        %v2021 = vmax.f32 %v1703, 0.0
        %v2022 = vmax.f32 %v1706, 0.0
        %v2023 = vmax.f32 %v1711, 0.0
        %v2024 = vmax.f32 %v1714, 0.0
        %v2025 = vmax.f32 %v1719, 0.0
        %v2026 = vmax.f32 %v1722, 0.0
        %v2027 = vmax.f32 %v1727, 0.0
        %v2028 = vmax.f32 %v1730, 0.0
        %v2029 = vmax.f32 %v1735, 0.0
        %v2030 = vmax.f32 %v1738, 0.0
        %v2031 = vmax.f32 %v1743, 0.0
        %v2032 = vmax.f32 %v1746, 0.0
        %v2033 = vmax.f32 %v1751, 0.0
        %v2034 = vmax.f32 %v1754, 0.0
        %v2035 = vmax.f32 %v1759, 0.0
        %v2036 = vmax.f32 %v1762, 0.0
        %v2037 = vmax.f32 %v1767, 0.0
        %v2038 = vmax.f32 %v1770, 0.0
        %v2039 = vmax.f32 %v1775, 0.0
        %v2040 = vmax.f32 %v1778, 0.0
        %v2041 = vmax.f32 %v1783, 0.0
        %v2042 = vmax.f32 %v1786, 0.0
        %v2043 = vmax.f32 %v1791, 0.0
        %v2044 = vmax.f32 %v1794, 0.0
        %v2045 = vmax.f32 %v1799, 0.0
        %v2046 = vmax.f32 %v1802, 0.0
        %v2047 = vmax.f32 %v1807, 0.0
        %v2048 = vmax.f32 %v1810, 0.0
        %v2049 = vmax.f32 %v1815, 0.0
        %v2050 = vmax.f32 %v1818, 0.0
        %v2051 = vmax.f32 %v1823, 0.0
        %v2052 = vmax.f32 %v1826, 0.0
        %v2053 = vmax.f32 %v1831, 0.0
        %v2054 = vmax.f32 %v1834, 0.0
        %v2055 = vmax.f32 %v1839, 0.0
        %v2056 = vmax.f32 %v1842, 0.0
        %v2057 = vmax.f32 %v1847, 0.0
        %v2058 = vmax.f32 %v1850, 0.0
        %v2059 = vmax.f32 %v1855, 0.0
        %v2060 = vmax.f32 %v1858, 0.0
        %v2061 = vmax.f32 %v1863, 0.0
        %v2062 = vmax.f32 %v1866, 0.0
        %v2063 = vmax.f32 %v1871, 0.0
        %v2064 = vmax.f32 %v1874, 0.0
        %v2065 = vmax.f32 %v1879, 0.0
        %v2066 = vmax.f32 %v1882, 0.0
        %v2067 = vmax.f32 %v1887, 0.0
        %v2068 = vmax.f32 %v1890, 0.0
        %v2069 = vmax.f32 %v1895, 0.0
        %v2070 = vmax.f32 %v1898, 0.0
        %v2071 = vmax.f32 %v1903, 0.0
        %v2072 = vmax.f32 %v1906, 0.0
        %v2073 = vmax.f32 %v1911, 0.0
        %v2074 = vmax.f32 %v1914, 0.0
        %v2075 = vmax.f32 %v1919, 0.0
        %v2076 = vmax.f32 %v1922, 0.0
        %v2077 = vmax.f32 %v1927, 0.0
        %v2078 = vmax.f32 %v1930, 0.0
        %v2079 = vmax.f32 %v1935, 0.0
        %v2080 = vmax.f32 %v1938, 0.0
        %v2081 = vmax.f32 %v1943, 0.0
        %v2082 = vmax.f32 %v1946, 0.0
        %v2083 = vmax.f32 %v1951, 0.0
        %v2084 = vmax.f32 %v1954, 0.0
        %v2085 = vpack.c.bf16 %v1958, %v1957
        %v2086 = vpack.c.bf16 %v1960, %v1959
        %v2087 = vpack.c.bf16 %v1962, %v1961
        %v2088 = vpack.c.bf16 %v1964, %v1963
        %v2089 = vpack.c.bf16 %v1966, %v1965
        %v2090 = vpack.c.bf16 %v1968, %v1967
        %v2091 = vpack.c.bf16 %v1970, %v1969
        %v2092 = vpack.c.bf16 %v1972, %v1971
        %v2093 = vpack.c.bf16 %v1974, %v1973
        %v2094 = vpack.c.bf16 %v1976, %v1975
        %v2095 = vpack.c.bf16 %v1978, %v1977
        %v2096 = vpack.c.bf16 %v1980, %v1979
        %v2097 = vpack.c.bf16 %v1982, %v1981
        %v2098 = vpack.c.bf16 %v1984, %v1983
        %v2099 = vpack.c.bf16 %v1986, %v1985
        %v2100 = vpack.c.bf16 %v1988, %v1987
        %v2101 = vpack.c.bf16 %v1990, %v1989
        %v2102 = vpack.c.bf16 %v1992, %v1991
        %v2103 = vpack.c.bf16 %v1994, %v1993
        %v2104 = vpack.c.bf16 %v1996, %v1995
        %v2105 = vpack.c.bf16 %v1998, %v1997
        %v2106 = vpack.c.bf16 %v2000, %v1999
        %v2107 = vpack.c.bf16 %v2002, %v2001
        %v2108 = vpack.c.bf16 %v2004, %v2003
        %v2109 = vpack.c.bf16 %v2006, %v2005
        %v2110 = vpack.c.bf16 %v2008, %v2007
        %v2111 = vpack.c.bf16 %v2010, %v2009
        %v2112 = vpack.c.bf16 %v2012, %v2011
        %v2113 = vpack.c.bf16 %v2014, %v2013
        %v2114 = vpack.c.bf16 %v2016, %v2015
        %v2115 = vpack.c.bf16 %v2018, %v2017
        %v2116 = vpack.c.bf16 %v2020, %v2019
        %v2117 = vpack.c.bf16 %v2022, %v2021
        %v2118 = vpack.c.bf16 %v2024, %v2023
        %v2119 = vpack.c.bf16 %v2026, %v2025
        %v2120 = vpack.c.bf16 %v2028, %v2027
        %v2121 = vpack.c.bf16 %v2030, %v2029
        %v2122 = vpack.c.bf16 %v2032, %v2031
        %v2123 = vpack.c.bf16 %v2034, %v2033
        %v2124 = vpack.c.bf16 %v2036, %v2035
        %v2125 = vpack.c.bf16 %v2038, %v2037
        %v2126 = vpack.c.bf16 %v2040, %v2039
        %v2127 = vpack.c.bf16 %v2042, %v2041
        %v2128 = vpack.c.bf16 %v2044, %v2043
        %v2129 = vpack.c.bf16 %v2046, %v2045
        %v2130 = vpack.c.bf16 %v2048, %v2047
        %v2131 = vpack.c.bf16 %v2050, %v2049
        %v2132 = vpack.c.bf16 %v2052, %v2051
        %v2133 = vpack.c.bf16 %v2054, %v2053
        %v2134 = vpack.c.bf16 %v2056, %v2055
        %v2135 = vpack.c.bf16 %v2058, %v2057
        %v2136 = vpack.c.bf16 %v2060, %v2059
        %v2137 = vpack.c.bf16 %v2062, %v2061
        %v2138 = vpack.c.bf16 %v2064, %v2063
        %v2139 = vpack.c.bf16 %v2066, %v2065
        %v2140 = vpack.c.bf16 %v2068, %v2067
        %v2141 = vpack.c.bf16 %v2070, %v2069
        %v2142 = vpack.c.bf16 %v2072, %v2071
        %v2143 = vpack.c.bf16 %v2074, %v2073
        %v2144 = vpack.c.bf16 %v2076, %v2075
        %v2145 = vpack.c.bf16 %v2078, %v2077
        %v2146 = vpack.c.bf16 %v2080, %v2079
        %v2147 = vpack.c.bf16 %v2082, %v2081
        %v2148 = vpack.c.bf16 %v2084, %v2083
        %s2149 = scalar_lea.vmem %s2, 64
        %v2150 = vld [vmem:[%s2149] sm:$0xf]
        %v2151 = vld [vmem:[%s2149 + $0x4] sm:$0xf]
        %v2152 = vld [vmem:[%s2149 + $0x8] sm:$0xf]
        %v2153 = vld [vmem:[%s2149 + $0xc] sm:$0xf]
        %v2154 = vld [vmem:[%s2149 + $0x10] sm:$0xf]
        %v2155 = vld [vmem:[%s2149 + $0x14] sm:$0xf]
        %v2156 = vld [vmem:[%s2149 + $0x18] sm:$0xf]
        %v2157 = vld [vmem:[%s2149 + $0x1c] sm:$0xf]
        %v2158 = vld [vmem:[%s2149 + $0x20] sm:$0xf]
        %v2159 = vld [vmem:[%s2149 + $0x24] sm:$0xf]
        %v2160 = vld [vmem:[%s2149 + $0x28] sm:$0xf]
        %v2161 = vld [vmem:[%s2149 + $0x2c] sm:$0xf]
        %v2162 = vld [vmem:[%s2149 + $0x30] sm:$0xf]
        %v2163 = vld [vmem:[%s2149 + $0x34] sm:$0xf]
        %v2164 = vld [vmem:[%s2149 + $0x38] sm:$0xf]
        %v2165 = vld [vmem:[%s2149 + $0x3c] sm:$0xf]
        %v2166 = vld [vmem:[%s3 + $0x2] sm:$0x1]
        %v2167 = vlaneseq
        %v2168 = vshrl.u32 %v2167, 7
        %v2169 = vsub.s32 0, %v2168
        %v2170 = vrot.slane %v2166, %v2169
        %v2187 = vunpack.c.l.b16 %v2150
        %v2188 = vunpack.c.l.b16 %v2151
        %v2189 = vunpack.c.l.b16 %v2152
        %v2190 = vunpack.c.l.b16 %v2153
        %v2191 = vunpack.c.l.b16 %v2154
        %v2192 = vunpack.c.l.b16 %v2155
        %v2193 = vunpack.c.l.b16 %v2156
        %v2194 = vunpack.c.l.b16 %v2157
        %v2195 = vunpack.c.l.b16 %v2158
        %v2196 = vunpack.c.l.b16 %v2159
        %v2197 = vunpack.c.l.b16 %v2160
        %v2198 = vunpack.c.l.b16 %v2161
        %v2199 = vunpack.c.l.b16 %v2162
        %v2200 = vunpack.c.l.b16 %v2163
        %v2201 = vunpack.c.l.b16 %v2164
        %v2202 = vunpack.c.l.b16 %v2165
        %v2203 = vpack.c.b16 %v2188, %v2187
        %v2204 = vpack.c.b16 %v2190, %v2189
        %v2205 = vpack.c.b16 %v2192, %v2191
        %v2206 = vpack.c.b16 %v2194, %v2193
        %v2207 = vpack.c.b16 %v2196, %v2195
        %v2208 = vpack.c.b16 %v2198, %v2197
        %v2209 = vpack.c.b16 %v2200, %v2199
        %v2210 = vpack.c.b16 %v2202, %v2201
        %2219 = vmatprep.subr.bf16.mxu0 0
        %2220 = vmatpush1.bf16.msra.mxu0 %v2203
        %2221 = vmatprep.subr.bf16.mxu0 0
        %2222 = vmatpush1.bf16.msra.mxu0 %v2204
        %2223 = vmatprep.subr.bf16.mxu0 0
        %2224 = vmatpush1.bf16.msra.mxu0 %v2205
        %2225 = vmatprep.subr.bf16.mxu0 0
        %2226 = vmatpush1.bf16.msra.mxu0 %v2206
        %2227 = vmatprep.subr.bf16.mxu0 0
        %2228 = vmatpush1.bf16.msra.mxu0 %v2207
        %2229 = vmatprep.subr.bf16.mxu0 0
        %2230 = vmatpush1.bf16.msra.mxu0 %v2208
        %2231 = vmatprep.subr.bf16.mxu0 0
        %2232 = vmatpush1.bf16.msra.mxu0 %v2209
        %2233 = vmatprep.subr.bf16.mxu0 0
        %2234 = vmatpush1.bf16.msra.mxu0 %v2210
        %2235 = vmatprep.subr.bf16.mxu0 0
        %2236 = vmatpush1.bf16.msra.mxu0 0
        %2237 = vmatprep.subr.bf16.mxu0 0
        %2238 = vmatpush1.bf16.msra.mxu0 0
        %2239 = vmatprep.subr.bf16.mxu0 0
        %2240 = vmatpush1.bf16.msra.mxu0 0
        %2241 = vmatprep.subr.bf16.mxu0 0
        %2242 = vmatpush1.bf16.msra.mxu0 0
        %2243 = vmatprep.subr.bf16.mxu0 0
        %2244 = vmatpush1.bf16.msra.mxu0 0
        %2245 = vmatprep.subr.bf16.mxu0 0
        %2246 = vmatpush1.bf16.msra.mxu0 0
        %2247 = vmatprep.subr.bf16.mxu0 0
        %2248 = vmatpush1.bf16.msra.mxu0 0
        %2249 = vmatprep.subr.bf16.mxu0 0
        %2250 = vmatpush1.bf16.msra.mxu0 0
        %2251 = vmatprep.mubr.bf16.mxu0 0
        %2252 = vmatmul.mubr.bf16.gmra.mrb[0].mxu0 %v2085
        %v2253 = vpop.f32.mrb[0].mxu0
        %v2254 = vadd.f32 %v2170, %v2253
        %v2255 = vpop.f32.mrb[0].mxu0
        %v2256 = vpop.f32.mrb[0].mxu0
        %v2257 = vadd.f32 %v2170, %v2256
        %v2258 = vpop.f32.mrb[0].mxu0
        %2259 = vmatprep.mubr.bf16.mxu0 0
        %2260 = vmatmul.mubr.bf16.gmra.mrb[0].mxu0 %v2086
        %v2261 = vpop.f32.mrb[0].mxu0
        %v2262 = vadd.f32 %v2170, %v2261
        %v2263 = vpop.f32.mrb[0].mxu0
        %v2264 = vpop.f32.mrb[0].mxu0
        %v2265 = vadd.f32 %v2170, %v2264
        %v2266 = vpop.f32.mrb[0].mxu0
        %2267 = vmatprep.mubr.bf16.mxu0 0
        %2268 = vmatmul.mubr.bf16.gmra.mrb[0].mxu0 %v2087
        %v2269 = vpop.f32.mrb[0].mxu0
        %v2270 = vadd.f32 %v2170, %v2269
        %v2271 = vpop.f32.mrb[0].mxu0
        %v2272 = vpop.f32.mrb[0].mxu0
        %v2273 = vadd.f32 %v2170, %v2272
        %v2274 = vpop.f32.mrb[0].mxu0
        %2275 = vmatprep.mubr.bf16.mxu0 0
        %2276 = vmatmul.mubr.bf16.gmra.mrb[0].mxu0 %v2088
        %v2277 = vpop.f32.mrb[0].mxu0
        %v2278 = vadd.f32 %v2170, %v2277
        %v2279 = vpop.f32.mrb[0].mxu0
        %v2280 = vpop.f32.mrb[0].mxu0
        %v2281 = vadd.f32 %v2170, %v2280
        %v2282 = vpop.f32.mrb[0].mxu0
        %2283 = vmatprep.mubr.bf16.mxu0 0
        %2284 = vmatmul.mubr.bf16.gmra.mrb[0].mxu0 %v2089
        %v2285 = vpop.f32.mrb[0].mxu0
        %v2286 = vadd.f32 %v2170, %v2285
        %v2287 = vpop.f32.mrb[0].mxu0
        %v2288 = vpop.f32.mrb[0].mxu0
        %v2289 = vadd.f32 %v2170, %v2288
        %v2290 = vpop.f32.mrb[0].mxu0
        %2291 = vmatprep.mubr.bf16.mxu0 0
        %2292 = vmatmul.mubr.bf16.gmra.mrb[0].mxu0 %v2090
        %v2293 = vpop.f32.mrb[0].mxu0
        %v2294 = vadd.f32 %v2170, %v2293
        %v2295 = vpop.f32.mrb[0].mxu0
        %v2296 = vpop.f32.mrb[0].mxu0
        %v2297 = vadd.f32 %v2170, %v2296
        %v2298 = vpop.f32.mrb[0].mxu0
        %2299 = vmatprep.mubr.bf16.mxu0 0
        %2300 = vmatmul.mubr.bf16.gmra.mrb[0].mxu0 %v2091
        %v2301 = vpop.f32.mrb[0].mxu0
        %v2302 = vadd.f32 %v2170, %v2301
        %v2303 = vpop.f32.mrb[0].mxu0
        %v2304 = vpop.f32.mrb[0].mxu0
        %v2305 = vadd.f32 %v2170, %v2304
        %v2306 = vpop.f32.mrb[0].mxu0
        %2307 = vmatprep.mubr.bf16.mxu0 0
        %2308 = vmatmul.mubr.bf16.gmra.mrb[0].mxu0 %v2092
        %v2309 = vpop.f32.mrb[0].mxu0
        %v2310 = vadd.f32 %v2170, %v2309
        %v2311 = vpop.f32.mrb[0].mxu0
        %v2312 = vpop.f32.mrb[0].mxu0
        %v2313 = vadd.f32 %v2170, %v2312
        %v2314 = vpop.f32.mrb[0].mxu0
        %2315 = vmatprep.mubr.bf16.mxu0 0
        %2316 = vmatmul.mubr.bf16.gmra.mrb[0].mxu0 %v2093
        %v2317 = vpop.f32.mrb[0].mxu0
        %v2318 = vadd.f32 %v2170, %v2317
        %v2319 = vpop.f32.mrb[0].mxu0
        %v2320 = vpop.f32.mrb[0].mxu0
        %v2321 = vadd.f32 %v2170, %v2320
        %v2322 = vpop.f32.mrb[0].mxu0
        %2323 = vmatprep.mubr.bf16.mxu0 0
        %2324 = vmatmul.mubr.bf16.gmra.mrb[0].mxu0 %v2094
        %v2325 = vpop.f32.mrb[0].mxu0
        %v2326 = vadd.f32 %v2170, %v2325
        %v2327 = vpop.f32.mrb[0].mxu0
        %v2328 = vpop.f32.mrb[0].mxu0
        %v2329 = vadd.f32 %v2170, %v2328
        %v2330 = vpop.f32.mrb[0].mxu0
        %2331 = vmatprep.mubr.bf16.mxu0 0
        %2332 = vmatmul.mubr.bf16.gmra.mrb[0].mxu0 %v2095
        %v2333 = vpop.f32.mrb[0].mxu0
        %v2334 = vadd.f32 %v2170, %v2333
        %v2335 = vpop.f32.mrb[0].mxu0
        %v2336 = vpop.f32.mrb[0].mxu0
        %v2337 = vadd.f32 %v2170, %v2336
        %v2338 = vpop.f32.mrb[0].mxu0
        %2339 = vmatprep.mubr.bf16.mxu0 0
        %2340 = vmatmul.mubr.bf16.gmra.mrb[0].mxu0 %v2096
        %v2341 = vpop.f32.mrb[0].mxu0
        %v2342 = vadd.f32 %v2170, %v2341
        %v2343 = vpop.f32.mrb[0].mxu0
        %v2344 = vpop.f32.mrb[0].mxu0
        %v2345 = vadd.f32 %v2170, %v2344
        %v2346 = vpop.f32.mrb[0].mxu0
        %2347 = vmatprep.mubr.bf16.mxu0 0
        %2348 = vmatmul.mubr.bf16.gmra.mrb[0].mxu0 %v2097
        %v2349 = vpop.f32.mrb[0].mxu0
        %v2350 = vadd.f32 %v2170, %v2349
        %v2351 = vpop.f32.mrb[0].mxu0
        %v2352 = vpop.f32.mrb[0].mxu0
        %v2353 = vadd.f32 %v2170, %v2352
        %v2354 = vpop.f32.mrb[0].mxu0
        %2355 = vmatprep.mubr.bf16.mxu0 0
        %2356 = vmatmul.mubr.bf16.gmra.mrb[0].mxu0 %v2098
        %v2357 = vpop.f32.mrb[0].mxu0
        %v2358 = vadd.f32 %v2170, %v2357
        %v2359 = vpop.f32.mrb[0].mxu0
        %v2360 = vpop.f32.mrb[0].mxu0
        %v2361 = vadd.f32 %v2170, %v2360
        %v2362 = vpop.f32.mrb[0].mxu0
        %2363 = vmatprep.mubr.bf16.mxu0 0
        %2364 = vmatmul.mubr.bf16.gmra.mrb[0].mxu0 %v2099
        %v2365 = vpop.f32.mrb[0].mxu0
        %v2366 = vadd.f32 %v2170, %v2365
        %v2367 = vpop.f32.mrb[0].mxu0
        %v2368 = vpop.f32.mrb[0].mxu0
        %v2369 = vadd.f32 %v2170, %v2368
        %v2370 = vpop.f32.mrb[0].mxu0
        %2371 = vmatprep.mubr.bf16.mxu0 0
        %2372 = vmatmul.mubr.bf16.gmra.mrb[0].mxu0 %v2100
        %v2373 = vpop.f32.mrb[0].mxu0
        %v2374 = vadd.f32 %v2170, %v2373
        %v2375 = vpop.f32.mrb[0].mxu0
        %v2376 = vpop.f32.mrb[0].mxu0
        %v2377 = vadd.f32 %v2170, %v2376
        %v2378 = vpop.f32.mrb[0].mxu0
        %2379 = vmatprep.mubr.bf16.mxu0 0
        %2380 = vmatmul.mubr.bf16.gmra.mrb[0].mxu0 %v2101
        %v2381 = vpop.f32.mrb[0].mxu0
        %v2382 = vadd.f32 %v2170, %v2381
        %v2383 = vpop.f32.mrb[0].mxu0
        %v2384 = vpop.f32.mrb[0].mxu0
        %v2385 = vadd.f32 %v2170, %v2384
        %v2386 = vpop.f32.mrb[0].mxu0
        %2387 = vmatprep.mubr.bf16.mxu0 0
        %2388 = vmatmul.mubr.bf16.gmra.mrb[0].mxu0 %v2102
        %v2389 = vpop.f32.mrb[0].mxu0
        %v2390 = vadd.f32 %v2170, %v2389
        %v2391 = vpop.f32.mrb[0].mxu0
        %v2392 = vpop.f32.mrb[0].mxu0
        %v2393 = vadd.f32 %v2170, %v2392
        %v2394 = vpop.f32.mrb[0].mxu0
        %2395 = vmatprep.mubr.bf16.mxu0 0
        %2396 = vmatmul.mubr.bf16.gmra.mrb[0].mxu0 %v2103
        %v2397 = vpop.f32.mrb[0].mxu0
        %v2398 = vadd.f32 %v2170, %v2397
        %v2399 = vpop.f32.mrb[0].mxu0
        %v2400 = vpop.f32.mrb[0].mxu0
        %v2401 = vadd.f32 %v2170, %v2400
        %v2402 = vpop.f32.mrb[0].mxu0
        %2403 = vmatprep.mubr.bf16.mxu0 0
        %2404 = vmatmul.mubr.bf16.gmra.mrb[0].mxu0 %v2104
        %v2405 = vpop.f32.mrb[0].mxu0
        %v2406 = vadd.f32 %v2170, %v2405
        %v2407 = vpop.f32.mrb[0].mxu0
        %v2408 = vpop.f32.mrb[0].mxu0
        %v2409 = vadd.f32 %v2170, %v2408
        %v2410 = vpop.f32.mrb[0].mxu0
        %2411 = vmatprep.mubr.bf16.mxu0 0
        %2412 = vmatmul.mubr.bf16.gmra.mrb[0].mxu0 %v2105
        %v2413 = vpop.f32.mrb[0].mxu0
        %v2414 = vadd.f32 %v2170, %v2413
        %v2415 = vpop.f32.mrb[0].mxu0
        %v2416 = vpop.f32.mrb[0].mxu0
        %v2417 = vadd.f32 %v2170, %v2416
        %v2418 = vpop.f32.mrb[0].mxu0
        %2419 = vmatprep.mubr.bf16.mxu0 0
        %2420 = vmatmul.mubr.bf16.gmra.mrb[0].mxu0 %v2106
        %v2421 = vpop.f32.mrb[0].mxu0
        %v2422 = vadd.f32 %v2170, %v2421
        %v2423 = vpop.f32.mrb[0].mxu0
        %v2424 = vpop.f32.mrb[0].mxu0
        %v2425 = vadd.f32 %v2170, %v2424
        %v2426 = vpop.f32.mrb[0].mxu0
        %2427 = vmatprep.mubr.bf16.mxu0 0
        %2428 = vmatmul.mubr.bf16.gmra.mrb[0].mxu0 %v2107
        %v2429 = vpop.f32.mrb[0].mxu0
        %v2430 = vadd.f32 %v2170, %v2429
        %v2431 = vpop.f32.mrb[0].mxu0
        %v2432 = vpop.f32.mrb[0].mxu0
        %v2433 = vadd.f32 %v2170, %v2432
        %v2434 = vpop.f32.mrb[0].mxu0
        %2435 = vmatprep.mubr.bf16.mxu0 0
        %2436 = vmatmul.mubr.bf16.gmra.mrb[0].mxu0 %v2108
        %v2437 = vpop.f32.mrb[0].mxu0
        %v2438 = vadd.f32 %v2170, %v2437
        %v2439 = vpop.f32.mrb[0].mxu0
        %v2440 = vpop.f32.mrb[0].mxu0
        %v2441 = vadd.f32 %v2170, %v2440
        %v2442 = vpop.f32.mrb[0].mxu0
        %2443 = vmatprep.mubr.bf16.mxu0 0
        %2444 = vmatmul.mubr.bf16.gmra.mrb[0].mxu0 %v2109
        %v2445 = vpop.f32.mrb[0].mxu0
        %v2446 = vadd.f32 %v2170, %v2445
        %v2447 = vpop.f32.mrb[0].mxu0
        %v2448 = vpop.f32.mrb[0].mxu0
        %v2449 = vadd.f32 %v2170, %v2448
        %v2450 = vpop.f32.mrb[0].mxu0
        %2451 = vmatprep.mubr.bf16.mxu0 0
        %2452 = vmatmul.mubr.bf16.gmra.mrb[0].mxu0 %v2110
        %v2453 = vpop.f32.mrb[0].mxu0
        %v2454 = vadd.f32 %v2170, %v2453
        %v2455 = vpop.f32.mrb[0].mxu0
        %v2456 = vpop.f32.mrb[0].mxu0
        %v2457 = vadd.f32 %v2170, %v2456
        %v2458 = vpop.f32.mrb[0].mxu0
        %2459 = vmatprep.mubr.bf16.mxu0 0
        %2460 = vmatmul.mubr.bf16.gmra.mrb[0].mxu0 %v2111
        %v2461 = vpop.f32.mrb[0].mxu0
        %v2462 = vadd.f32 %v2170, %v2461
        %v2463 = vpop.f32.mrb[0].mxu0
        %v2464 = vpop.f32.mrb[0].mxu0
        %v2465 = vadd.f32 %v2170, %v2464
        %v2466 = vpop.f32.mrb[0].mxu0
        %2467 = vmatprep.mubr.bf16.mxu0 0
        %2468 = vmatmul.mubr.bf16.gmra.mrb[0].mxu0 %v2112
        %v2469 = vpop.f32.mrb[0].mxu0
        %v2470 = vadd.f32 %v2170, %v2469
        %v2471 = vpop.f32.mrb[0].mxu0
        %v2472 = vpop.f32.mrb[0].mxu0
        %v2473 = vadd.f32 %v2170, %v2472
        %v2474 = vpop.f32.mrb[0].mxu0
        %2475 = vmatprep.mubr.bf16.mxu0 0
        %2476 = vmatmul.mubr.bf16.gmra.mrb[0].mxu0 %v2113
        %v2477 = vpop.f32.mrb[0].mxu0
        %v2478 = vadd.f32 %v2170, %v2477
        %v2479 = vpop.f32.mrb[0].mxu0
        %v2480 = vpop.f32.mrb[0].mxu0
        %v2481 = vadd.f32 %v2170, %v2480
        %v2482 = vpop.f32.mrb[0].mxu0
        %2483 = vmatprep.mubr.bf16.mxu0 0
        %2484 = vmatmul.mubr.bf16.gmra.mrb[0].mxu0 %v2114
        %v2485 = vpop.f32.mrb[0].mxu0
        %v2486 = vadd.f32 %v2170, %v2485
        %v2487 = vpop.f32.mrb[0].mxu0
        %v2488 = vpop.f32.mrb[0].mxu0
        %v2489 = vadd.f32 %v2170, %v2488
        %v2490 = vpop.f32.mrb[0].mxu0
        %2491 = vmatprep.mubr.bf16.mxu0 0
        %2492 = vmatmul.mubr.bf16.gmra.mrb[0].mxu0 %v2115
        %v2493 = vpop.f32.mrb[0].mxu0
        %v2494 = vadd.f32 %v2170, %v2493
        %v2495 = vpop.f32.mrb[0].mxu0
        %v2496 = vpop.f32.mrb[0].mxu0
        %v2497 = vadd.f32 %v2170, %v2496
        %v2498 = vpop.f32.mrb[0].mxu0
        %2499 = vmatprep.mubr.bf16.mxu0 0
        %2500 = vmatmul.mubr.bf16.gmra.mrb[0].mxu0 %v2116
        %v2501 = vpop.f32.mrb[0].mxu0
        %v2502 = vadd.f32 %v2170, %v2501
        %v2503 = vpop.f32.mrb[0].mxu0
        %v2504 = vpop.f32.mrb[0].mxu0
        %v2505 = vadd.f32 %v2170, %v2504
        %v2506 = vpop.f32.mrb[0].mxu0
        %2507 = vmatprep.mubr.bf16.mxu0 0
        %2508 = vmatmul.mubr.bf16.gmra.mrb[0].mxu0 %v2117
        %v2509 = vpop.f32.mrb[0].mxu0
        %v2510 = vadd.f32 %v2170, %v2509
        %v2511 = vpop.f32.mrb[0].mxu0
        %v2512 = vpop.f32.mrb[0].mxu0
        %v2513 = vadd.f32 %v2170, %v2512
        %v2514 = vpop.f32.mrb[0].mxu0
        %2515 = vmatprep.mubr.bf16.mxu0 0
        %2516 = vmatmul.mubr.bf16.gmra.mrb[0].mxu0 %v2118
        %v2517 = vpop.f32.mrb[0].mxu0
        %v2518 = vadd.f32 %v2170, %v2517
        %v2519 = vpop.f32.mrb[0].mxu0
        %v2520 = vpop.f32.mrb[0].mxu0
        %v2521 = vadd.f32 %v2170, %v2520
        %v2522 = vpop.f32.mrb[0].mxu0
        %2523 = vmatprep.mubr.bf16.mxu0 0
        %2524 = vmatmul.mubr.bf16.gmra.mrb[0].mxu0 %v2119
        %v2525 = vpop.f32.mrb[0].mxu0
        %v2526 = vadd.f32 %v2170, %v2525
        %v2527 = vpop.f32.mrb[0].mxu0
        %v2528 = vpop.f32.mrb[0].mxu0
        %v2529 = vadd.f32 %v2170, %v2528
        %v2530 = vpop.f32.mrb[0].mxu0
        %2531 = vmatprep.mubr.bf16.mxu0 0
        %2532 = vmatmul.mubr.bf16.gmra.mrb[0].mxu0 %v2120
        %v2533 = vpop.f32.mrb[0].mxu0
        %v2534 = vadd.f32 %v2170, %v2533
        %v2535 = vpop.f32.mrb[0].mxu0
        %v2536 = vpop.f32.mrb[0].mxu0
        %v2537 = vadd.f32 %v2170, %v2536
        %v2538 = vpop.f32.mrb[0].mxu0
        %2539 = vmatprep.mubr.bf16.mxu0 0
        %2540 = vmatmul.mubr.bf16.gmra.mrb[0].mxu0 %v2121
        %v2541 = vpop.f32.mrb[0].mxu0
        %v2542 = vadd.f32 %v2170, %v2541
        %v2543 = vpop.f32.mrb[0].mxu0
        %v2544 = vpop.f32.mrb[0].mxu0
        %v2545 = vadd.f32 %v2170, %v2544
        %v2546 = vpop.f32.mrb[0].mxu0
        %2547 = vmatprep.mubr.bf16.mxu0 0
        %2548 = vmatmul.mubr.bf16.gmra.mrb[0].mxu0 %v2122
        %v2549 = vpop.f32.mrb[0].mxu0
        %v2550 = vadd.f32 %v2170, %v2549
        %v2551 = vpop.f32.mrb[0].mxu0
        %v2552 = vpop.f32.mrb[0].mxu0
        %v2553 = vadd.f32 %v2170, %v2552
        %v2554 = vpop.f32.mrb[0].mxu0
        %2555 = vmatprep.mubr.bf16.mxu0 0
        %2556 = vmatmul.mubr.bf16.gmra.mrb[0].mxu0 %v2123
        %v2557 = vpop.f32.mrb[0].mxu0
        %v2558 = vadd.f32 %v2170, %v2557
        %v2559 = vpop.f32.mrb[0].mxu0
        %v2560 = vpop.f32.mrb[0].mxu0
        %v2561 = vadd.f32 %v2170, %v2560
        %v2562 = vpop.f32.mrb[0].mxu0
        %2563 = vmatprep.mubr.bf16.mxu0 0
        %2564 = vmatmul.mubr.bf16.gmra.mrb[0].mxu0 %v2124
        %v2565 = vpop.f32.mrb[0].mxu0
        %v2566 = vadd.f32 %v2170, %v2565
        %v2567 = vpop.f32.mrb[0].mxu0
        %v2568 = vpop.f32.mrb[0].mxu0
        %v2569 = vadd.f32 %v2170, %v2568
        %v2570 = vpop.f32.mrb[0].mxu0
        %2571 = vmatprep.mubr.bf16.mxu0 0
        %2572 = vmatmul.mubr.bf16.gmra.mrb[0].mxu0 %v2125
        %v2573 = vpop.f32.mrb[0].mxu0
        %v2574 = vadd.f32 %v2170, %v2573
        %v2575 = vpop.f32.mrb[0].mxu0
        %v2576 = vpop.f32.mrb[0].mxu0
        %v2577 = vadd.f32 %v2170, %v2576
        %v2578 = vpop.f32.mrb[0].mxu0
        %2579 = vmatprep.mubr.bf16.mxu0 0
        %2580 = vmatmul.mubr.bf16.gmra.mrb[0].mxu0 %v2126
        %v2581 = vpop.f32.mrb[0].mxu0
        %v2582 = vadd.f32 %v2170, %v2581
        %v2583 = vpop.f32.mrb[0].mxu0
        %v2584 = vpop.f32.mrb[0].mxu0
        %v2585 = vadd.f32 %v2170, %v2584
        %v2586 = vpop.f32.mrb[0].mxu0
        %2587 = vmatprep.mubr.bf16.mxu0 0
        %2588 = vmatmul.mubr.bf16.gmra.mrb[0].mxu0 %v2127
        %v2589 = vpop.f32.mrb[0].mxu0
        %v2590 = vadd.f32 %v2170, %v2589
        %v2591 = vpop.f32.mrb[0].mxu0
        %v2592 = vpop.f32.mrb[0].mxu0
        %v2593 = vadd.f32 %v2170, %v2592
        %v2594 = vpop.f32.mrb[0].mxu0
        %2595 = vmatprep.mubr.bf16.mxu0 0
        %2596 = vmatmul.mubr.bf16.gmra.mrb[0].mxu0 %v2128
        %v2597 = vpop.f32.mrb[0].mxu0
        %v2598 = vadd.f32 %v2170, %v2597
        %v2599 = vpop.f32.mrb[0].mxu0
        %v2600 = vpop.f32.mrb[0].mxu0
        %v2601 = vadd.f32 %v2170, %v2600
        %v2602 = vpop.f32.mrb[0].mxu0
        %2603 = vmatprep.mubr.bf16.mxu0 0
        %2604 = vmatmul.mubr.bf16.gmra.mrb[0].mxu0 %v2129
        %v2605 = vpop.f32.mrb[0].mxu0
        %v2606 = vadd.f32 %v2170, %v2605
        %v2607 = vpop.f32.mrb[0].mxu0
        %v2608 = vpop.f32.mrb[0].mxu0
        %v2609 = vadd.f32 %v2170, %v2608
        %v2610 = vpop.f32.mrb[0].mxu0
        %2611 = vmatprep.mubr.bf16.mxu0 0
        %2612 = vmatmul.mubr.bf16.gmra.mrb[0].mxu0 %v2130
        %v2613 = vpop.f32.mrb[0].mxu0
        %v2614 = vadd.f32 %v2170, %v2613
        %v2615 = vpop.f32.mrb[0].mxu0
        %v2616 = vpop.f32.mrb[0].mxu0
        %v2617 = vadd.f32 %v2170, %v2616
        %v2618 = vpop.f32.mrb[0].mxu0
        %2619 = vmatprep.mubr.bf16.mxu0 0
        %2620 = vmatmul.mubr.bf16.gmra.mrb[0].mxu0 %v2131
        %v2621 = vpop.f32.mrb[0].mxu0
        %v2622 = vadd.f32 %v2170, %v2621
        %v2623 = vpop.f32.mrb[0].mxu0
        %v2624 = vpop.f32.mrb[0].mxu0
        %v2625 = vadd.f32 %v2170, %v2624
        %v2626 = vpop.f32.mrb[0].mxu0
        %2627 = vmatprep.mubr.bf16.mxu0 0
        %2628 = vmatmul.mubr.bf16.gmra.mrb[0].mxu0 %v2132
        %v2629 = vpop.f32.mrb[0].mxu0
        %v2630 = vadd.f32 %v2170, %v2629
        %v2631 = vpop.f32.mrb[0].mxu0
        %v2632 = vpop.f32.mrb[0].mxu0
        %v2633 = vadd.f32 %v2170, %v2632
        %v2634 = vpop.f32.mrb[0].mxu0
        %2635 = vmatprep.mubr.bf16.mxu0 0
        %2636 = vmatmul.mubr.bf16.gmra.mrb[0].mxu0 %v2133
        %v2637 = vpop.f32.mrb[0].mxu0
        %v2638 = vadd.f32 %v2170, %v2637
        %v2639 = vpop.f32.mrb[0].mxu0
        %v2640 = vpop.f32.mrb[0].mxu0
        %v2641 = vadd.f32 %v2170, %v2640
        %v2642 = vpop.f32.mrb[0].mxu0
        %2643 = vmatprep.mubr.bf16.mxu0 0
        %2644 = vmatmul.mubr.bf16.gmra.mrb[0].mxu0 %v2134
        %v2645 = vpop.f32.mrb[0].mxu0
        %v2646 = vadd.f32 %v2170, %v2645
        %v2647 = vpop.f32.mrb[0].mxu0
        %v2648 = vpop.f32.mrb[0].mxu0
        %v2649 = vadd.f32 %v2170, %v2648
        %v2650 = vpop.f32.mrb[0].mxu0
        %2651 = vmatprep.mubr.bf16.mxu0 0
        %2652 = vmatmul.mubr.bf16.gmra.mrb[0].mxu0 %v2135
        %v2653 = vpop.f32.mrb[0].mxu0
        %v2654 = vadd.f32 %v2170, %v2653
        %v2655 = vpop.f32.mrb[0].mxu0
        %v2656 = vpop.f32.mrb[0].mxu0
        %v2657 = vadd.f32 %v2170, %v2656
        %v2658 = vpop.f32.mrb[0].mxu0
        %2659 = vmatprep.mubr.bf16.mxu0 0
        %2660 = vmatmul.mubr.bf16.gmra.mrb[0].mxu0 %v2136
        %v2661 = vpop.f32.mrb[0].mxu0
        %v2662 = vadd.f32 %v2170, %v2661
        %v2663 = vpop.f32.mrb[0].mxu0
        %v2664 = vpop.f32.mrb[0].mxu0
        %v2665 = vadd.f32 %v2170, %v2664
        %v2666 = vpop.f32.mrb[0].mxu0
        %2667 = vmatprep.mubr.bf16.mxu0 0
        %2668 = vmatmul.mubr.bf16.gmra.mrb[0].mxu0 %v2137
        %v2669 = vpop.f32.mrb[0].mxu0
        %v2670 = vadd.f32 %v2170, %v2669
        %v2671 = vpop.f32.mrb[0].mxu0
        %v2672 = vpop.f32.mrb[0].mxu0
        %v2673 = vadd.f32 %v2170, %v2672
        %v2674 = vpop.f32.mrb[0].mxu0
        %2675 = vmatprep.mubr.bf16.mxu0 0
        %2676 = vmatmul.mubr.bf16.gmra.mrb[0].mxu0 %v2138
        %v2677 = vpop.f32.mrb[0].mxu0
        %v2678 = vadd.f32 %v2170, %v2677
        %v2679 = vpop.f32.mrb[0].mxu0
        %v2680 = vpop.f32.mrb[0].mxu0
        %v2681 = vadd.f32 %v2170, %v2680
        %v2682 = vpop.f32.mrb[0].mxu0
        %2683 = vmatprep.mubr.bf16.mxu0 0
        %2684 = vmatmul.mubr.bf16.gmra.mrb[0].mxu0 %v2139
        %v2685 = vpop.f32.mrb[0].mxu0
        %v2686 = vadd.f32 %v2170, %v2685
        %v2687 = vpop.f32.mrb[0].mxu0
        %v2688 = vpop.f32.mrb[0].mxu0
        %v2689 = vadd.f32 %v2170, %v2688
        %v2690 = vpop.f32.mrb[0].mxu0
        %2691 = vmatprep.mubr.bf16.mxu0 0
        %2692 = vmatmul.mubr.bf16.gmra.mrb[0].mxu0 %v2140
        %v2693 = vpop.f32.mrb[0].mxu0
        %v2694 = vadd.f32 %v2170, %v2693
        %v2695 = vpop.f32.mrb[0].mxu0
        %v2696 = vpop.f32.mrb[0].mxu0
        %v2697 = vadd.f32 %v2170, %v2696
        %v2698 = vpop.f32.mrb[0].mxu0
        %2699 = vmatprep.mubr.bf16.mxu0 0
        %2700 = vmatmul.mubr.bf16.gmra.mrb[0].mxu0 %v2141
        %v2701 = vpop.f32.mrb[0].mxu0
        %v2702 = vadd.f32 %v2170, %v2701
        %v2703 = vpop.f32.mrb[0].mxu0
        %v2704 = vpop.f32.mrb[0].mxu0
        %v2705 = vadd.f32 %v2170, %v2704
        %v2706 = vpop.f32.mrb[0].mxu0
        %2707 = vmatprep.mubr.bf16.mxu0 0
        %2708 = vmatmul.mubr.bf16.gmra.mrb[0].mxu0 %v2142
        %v2709 = vpop.f32.mrb[0].mxu0
        %v2710 = vadd.f32 %v2170, %v2709
        %v2711 = vpop.f32.mrb[0].mxu0
        %v2712 = vpop.f32.mrb[0].mxu0
        %v2713 = vadd.f32 %v2170, %v2712
        %v2714 = vpop.f32.mrb[0].mxu0
        %2715 = vmatprep.mubr.bf16.mxu0 0
        %2716 = vmatmul.mubr.bf16.gmra.mrb[0].mxu0 %v2143
        %v2717 = vpop.f32.mrb[0].mxu0
        %v2718 = vadd.f32 %v2170, %v2717
        %v2719 = vpop.f32.mrb[0].mxu0
        %v2720 = vpop.f32.mrb[0].mxu0
        %v2721 = vadd.f32 %v2170, %v2720
        %v2722 = vpop.f32.mrb[0].mxu0
        %2723 = vmatprep.mubr.bf16.mxu0 0
        %2724 = vmatmul.mubr.bf16.gmra.mrb[0].mxu0 %v2144
        %v2725 = vpop.f32.mrb[0].mxu0
        %v2726 = vadd.f32 %v2170, %v2725
        %v2727 = vpop.f32.mrb[0].mxu0
        %v2728 = vpop.f32.mrb[0].mxu0
        %v2729 = vadd.f32 %v2170, %v2728
        %v2730 = vpop.f32.mrb[0].mxu0
        %2731 = vmatprep.mubr.bf16.mxu0 0
        %2732 = vmatmul.mubr.bf16.gmra.mrb[0].mxu0 %v2145
        %v2733 = vpop.f32.mrb[0].mxu0
        %v2734 = vadd.f32 %v2170, %v2733
        %v2735 = vpop.f32.mrb[0].mxu0
        %v2736 = vpop.f32.mrb[0].mxu0
        %v2737 = vadd.f32 %v2170, %v2736
        %v2738 = vpop.f32.mrb[0].mxu0
        %2739 = vmatprep.mubr.bf16.mxu0 0
        %2740 = vmatmul.mubr.bf16.gmra.mrb[0].mxu0 %v2146
        %v2741 = vpop.f32.mrb[0].mxu0
        %v2742 = vadd.f32 %v2170, %v2741
        %v2743 = vpop.f32.mrb[0].mxu0
        %v2744 = vpop.f32.mrb[0].mxu0
        %v2745 = vadd.f32 %v2170, %v2744
        %v2746 = vpop.f32.mrb[0].mxu0
        %2747 = vmatprep.mubr.bf16.mxu0 0
        %2748 = vmatmul.mubr.bf16.gmra.mrb[0].mxu0 %v2147
        %v2749 = vpop.f32.mrb[0].mxu0
        %v2750 = vadd.f32 %v2170, %v2749
        %v2751 = vpop.f32.mrb[0].mxu0
        %v2752 = vpop.f32.mrb[0].mxu0
        %v2753 = vadd.f32 %v2170, %v2752
        %v2754 = vpop.f32.mrb[0].mxu0
        %2755 = vmatprep.mubr.bf16.mxu0 0
        %2756 = vmatmul.mubr.bf16.gmra.mrb[0].mxu0 %v2148
        %v2757 = vpop.f32.mrb[0].mxu0
        %v2758 = vadd.f32 %v2170, %v2757
        %v2759 = vpop.f32.mrb[0].mxu0
        %v2760 = vpop.f32.mrb[0].mxu0
        %v2761 = vadd.f32 %v2170, %v2760
        %v2762 = vpop.f32.mrb[0].mxu0
        %2763 = vdwg.mxu0
        %2764 = vst [vmem:[%s191] sm:$0xff] %v2254
        %2765 = vst [vmem:[%s191 + $0x8] sm:$0xff] %v2257
        %2766 = vst [vmem:[%s191 + $0x10] sm:$0xff] %v2262
        %2767 = vst [vmem:[%s191 + $0x18] sm:$0xff] %v2265
        %2768 = vst [vmem:[%s191 + $0x20] sm:$0xff] %v2270
        %2769 = vst [vmem:[%s191 + $0x28] sm:$0xff] %v2273
        %2770 = vst [vmem:[%s191 + $0x30] sm:$0xff] %v2278
        %2771 = vst [vmem:[%s191 + $0x38] sm:$0xff] %v2281
        %2772 = vst [vmem:[%s191 + $0x40] sm:$0xff] %v2286
        %2773 = vst [vmem:[%s191 + $0x48] sm:$0xff] %v2289
        %2774 = vst [vmem:[%s191 + $0x50] sm:$0xff] %v2294
        %2775 = vst [vmem:[%s191 + $0x58] sm:$0xff] %v2297
        %2776 = vst [vmem:[%s191 + $0x60] sm:$0xff] %v2302
        %2777 = vst [vmem:[%s191 + $0x68] sm:$0xff] %v2305
        %2778 = vst [vmem:[%s191 + $0x70] sm:$0xff] %v2310
        %2779 = vst [vmem:[%s191 + $0x78] sm:$0xff] %v2313
        %2780 = vst [vmem:[%s191 + $0x80] sm:$0xff] %v2318
        %2781 = vst [vmem:[%s191 + $0x88] sm:$0xff] %v2321
        %2782 = vst [vmem:[%s191 + $0x90] sm:$0xff] %v2326
        %2783 = vst [vmem:[%s191 + $0x98] sm:$0xff] %v2329
        %2784 = vst [vmem:[%s191 + $0xa0] sm:$0xff] %v2334
        %2785 = vst [vmem:[%s191 + $0xa8] sm:$0xff] %v2337
        %2786 = vst [vmem:[%s191 + $0xb0] sm:$0xff] %v2342
        %2787 = vst [vmem:[%s191 + $0xb8] sm:$0xff] %v2345
        %2788 = vst [vmem:[%s191 + $0xc0] sm:$0xff] %v2350
        %2789 = vst [vmem:[%s191 + $0xc8] sm:$0xff] %v2353
        %2790 = vst [vmem:[%s191 + $0xd0] sm:$0xff] %v2358
        %2791 = vst [vmem:[%s191 + $0xd8] sm:$0xff] %v2361
        %2792 = vst [vmem:[%s191 + $0xe0] sm:$0xff] %v2366
        %2793 = vst [vmem:[%s191 + $0xe8] sm:$0xff] %v2369
        %2794 = vst [vmem:[%s191 + $0xf0] sm:$0xff] %v2374
        %2795 = vst [vmem:[%s191 + $0xf8] sm:$0xff] %v2377
        %2796 = vst [vmem:[%s191 + $0x100] sm:$0xff] %v2382
        %2797 = vst [vmem:[%s191 + $0x108] sm:$0xff] %v2385
        %2798 = vst [vmem:[%s191 + $0x110] sm:$0xff] %v2390
        %2799 = vst [vmem:[%s191 + $0x118] sm:$0xff] %v2393
        %2800 = vst [vmem:[%s191 + $0x120] sm:$0xff] %v2398
        %2801 = vst [vmem:[%s191 + $0x128] sm:$0xff] %v2401
        %2802 = vst [vmem:[%s191 + $0x130] sm:$0xff] %v2406
        %2803 = vst [vmem:[%s191 + $0x138] sm:$0xff] %v2409
        %2804 = vst [vmem:[%s191 + $0x140] sm:$0xff] %v2414
        %2805 = vst [vmem:[%s191 + $0x148] sm:$0xff] %v2417
        %2806 = vst [vmem:[%s191 + $0x150] sm:$0xff] %v2422
        %2807 = vst [vmem:[%s191 + $0x158] sm:$0xff] %v2425
        %2808 = vst [vmem:[%s191 + $0x160] sm:$0xff] %v2430
        %2809 = vst [vmem:[%s191 + $0x168] sm:$0xff] %v2433
        %2810 = vst [vmem:[%s191 + $0x170] sm:$0xff] %v2438
        %2811 = vst [vmem:[%s191 + $0x178] sm:$0xff] %v2441
        %2812 = vst [vmem:[%s191 + $0x180] sm:$0xff] %v2446
        %2813 = vst [vmem:[%s191 + $0x188] sm:$0xff] %v2449
        %2814 = vst [vmem:[%s191 + $0x190] sm:$0xff] %v2454
        %2815 = vst [vmem:[%s191 + $0x198] sm:$0xff] %v2457
        %2816 = vst [vmem:[%s191 + $0x1a0] sm:$0xff] %v2462
        %2817 = vst [vmem:[%s191 + $0x1a8] sm:$0xff] %v2465
        %2818 = vst [vmem:[%s191 + $0x1b0] sm:$0xff] %v2470
        %2819 = vst [vmem:[%s191 + $0x1b8] sm:$0xff] %v2473
        %2820 = vst [vmem:[%s191 + $0x1c0] sm:$0xff] %v2478
        %2821 = vst [vmem:[%s191 + $0x1c8] sm:$0xff] %v2481
        %2822 = vst [vmem:[%s191 + $0x1d0] sm:$0xff] %v2486
        %2823 = vst [vmem:[%s191 + $0x1d8] sm:$0xff] %v2489
        %2824 = vst [vmem:[%s191 + $0x1e0] sm:$0xff] %v2494
        %2825 = vst [vmem:[%s191 + $0x1e8] sm:$0xff] %v2497
        %2826 = vst [vmem:[%s191 + $0x1f0] sm:$0xff] %v2502
        %2827 = vst [vmem:[%s191 + $0x1f8] sm:$0xff] %v2505
        %2828 = vst [vmem:[%s191 + $0x200] sm:$0xff] %v2510
        %2829 = vst [vmem:[%s191 + $0x208] sm:$0xff] %v2513
        %2830 = vst [vmem:[%s191 + $0x210] sm:$0xff] %v2518
        %2831 = vst [vmem:[%s191 + $0x218] sm:$0xff] %v2521
        %2832 = vst [vmem:[%s191 + $0x220] sm:$0xff] %v2526
        %2833 = vst [vmem:[%s191 + $0x228] sm:$0xff] %v2529
        %2834 = vst [vmem:[%s191 + $0x230] sm:$0xff] %v2534
        %2835 = vst [vmem:[%s191 + $0x238] sm:$0xff] %v2537
        %2836 = vst [vmem:[%s191 + $0x240] sm:$0xff] %v2542
        %2837 = vst [vmem:[%s191 + $0x248] sm:$0xff] %v2545
        %2838 = vst [vmem:[%s191 + $0x250] sm:$0xff] %v2550
        %2839 = vst [vmem:[%s191 + $0x258] sm:$0xff] %v2553
        %2840 = vst [vmem:[%s191 + $0x260] sm:$0xff] %v2558
        %2841 = vst [vmem:[%s191 + $0x268] sm:$0xff] %v2561
        %2842 = vst [vmem:[%s191 + $0x270] sm:$0xff] %v2566
        %2843 = vst [vmem:[%s191 + $0x278] sm:$0xff] %v2569
        %2844 = vst [vmem:[%s191 + $0x280] sm:$0xff] %v2574
        %2845 = vst [vmem:[%s191 + $0x288] sm:$0xff] %v2577
        %2846 = vst [vmem:[%s191 + $0x290] sm:$0xff] %v2582
        %2847 = vst [vmem:[%s191 + $0x298] sm:$0xff] %v2585
        %2848 = vst [vmem:[%s191 + $0x2a0] sm:$0xff] %v2590
        %2849 = vst [vmem:[%s191 + $0x2a8] sm:$0xff] %v2593
        %2850 = vst [vmem:[%s191 + $0x2b0] sm:$0xff] %v2598
        %2851 = vst [vmem:[%s191 + $0x2b8] sm:$0xff] %v2601
        %2852 = vst [vmem:[%s191 + $0x2c0] sm:$0xff] %v2606
        %2853 = vst [vmem:[%s191 + $0x2c8] sm:$0xff] %v2609
        %2854 = vst [vmem:[%s191 + $0x2d0] sm:$0xff] %v2614
        %2855 = vst [vmem:[%s191 + $0x2d8] sm:$0xff] %v2617
        %2856 = vst [vmem:[%s191 + $0x2e0] sm:$0xff] %v2622
        %2857 = vst [vmem:[%s191 + $0x2e8] sm:$0xff] %v2625
        %2858 = vst [vmem:[%s191 + $0x2f0] sm:$0xff] %v2630
        %2859 = vst [vmem:[%s191 + $0x2f8] sm:$0xff] %v2633
        %2860 = vst [vmem:[%s191 + $0x300] sm:$0xff] %v2638
        %2861 = vst [vmem:[%s191 + $0x308] sm:$0xff] %v2641
        %2862 = vst [vmem:[%s191 + $0x310] sm:$0xff] %v2646
        %2863 = vst [vmem:[%s191 + $0x318] sm:$0xff] %v2649
        %2864 = vst [vmem:[%s191 + $0x320] sm:$0xff] %v2654
        %2865 = vst [vmem:[%s191 + $0x328] sm:$0xff] %v2657
        %2866 = vst [vmem:[%s191 + $0x330] sm:$0xff] %v2662
        %2867 = vst [vmem:[%s191 + $0x338] sm:$0xff] %v2665
        %2868 = vst [vmem:[%s191 + $0x340] sm:$0xff] %v2670
        %2869 = vst [vmem:[%s191 + $0x348] sm:$0xff] %v2673
        %2870 = vst [vmem:[%s191 + $0x350] sm:$0xff] %v2678
        %2871 = vst [vmem:[%s191 + $0x358] sm:$0xff] %v2681
        %2872 = vst [vmem:[%s191 + $0x360] sm:$0xff] %v2686
        %2873 = vst [vmem:[%s191 + $0x368] sm:$0xff] %v2689
        %2874 = vst [vmem:[%s191 + $0x370] sm:$0xff] %v2694
        %2875 = vst [vmem:[%s191 + $0x378] sm:$0xff] %v2697
        %2876 = vst [vmem:[%s191 + $0x380] sm:$0xff] %v2702
        %2877 = vst [vmem:[%s191 + $0x388] sm:$0xff] %v2705
        %2878 = vst [vmem:[%s191 + $0x390] sm:$0xff] %v2710
        %2879 = vst [vmem:[%s191 + $0x398] sm:$0xff] %v2713
        %2880 = vst [vmem:[%s191 + $0x3a0] sm:$0xff] %v2718
        %2881 = vst [vmem:[%s191 + $0x3a8] sm:$0xff] %v2721
        %2882 = vst [vmem:[%s191 + $0x3b0] sm:$0xff] %v2726
        %2883 = vst [vmem:[%s191 + $0x3b8] sm:$0xff] %v2729
        %2884 = vst [vmem:[%s191 + $0x3c0] sm:$0xff] %v2734
        %2885 = vst [vmem:[%s191 + $0x3c8] sm:$0xff] %v2737
        %2886 = vst [vmem:[%s191 + $0x3d0] sm:$0xff] %v2742
        %2887 = vst [vmem:[%s191 + $0x3d8] sm:$0xff] %v2745
        %2888 = vst [vmem:[%s191 + $0x3e0] sm:$0xff] %v2750
        %2889 = vst [vmem:[%s191 + $0x3e8] sm:$0xff] %v2753
        %2890 = vst [vmem:[%s191 + $0x3f0] sm:$0xff] %v2758
        %2891 = vst [vmem:[%s191 + $0x3f8] sm:$0xff] %v2761
        %s2892 = sand.u32 %s115, 1
        %s2893 = scalar_lea.sflag [#allocation3], %s2892
        %s2894 = sand.u32 %s115, 1
        %s2895 = smul.addr %s2894, 1024
        %s2896 = scalar_lea.vmem [#allocation2], %s2895
        // Predicated region
        $region37: #{tpu_custom_call.1} parent=35 // pred_check
          %p2897 = pneg %p125
        $region38: #{tpu_custom_call.1} parent=35 // pred_check_branch
          %2899 = sbr.rel (%p2897) target = $region40
        $region39: #{tpu_custom_call.1} parent=35 // pred_region
          %s2900 = smul.u32 128, %s18
          %s2902 = ssub.s32 16384, 16384
          %2903 = vsyncadd %s2893, %s2902
          %s2904 = smul.addr %s2900, 128
          %s2905 = scalar_lea.hbm %s4, %s2904
          %s2906 = sshll.u32 %s2896, 4
          %s2907 = int_to_ptr.vmem [resolvable:$true] %s2906
          %2912 = dma.vmem_to_hbm [thread:$0]  %s2907, 16384, %s2905, %s2893, 128, 128, 8
        $region40: #{tpu_custom_call.1} parent=35 // pred_fallthru
          _
      $region36: #{tpu_custom_call.1} parent=5 // pred_fallthru
        _
      %p2913 = scmp.le.s32.totalorder 2, %s13
      // Predicated region
      $region41: #{tpu_custom_call.1} parent=5 // pred_check
        %p2914 = pneg %p2913
      $region42: #{tpu_custom_call.1} parent=5 // pred_check_branch
        %2916 = sbr.rel (%p2914) target = $region44
      $region43: #{tpu_custom_call.1} parent=5 // pred_region
        %s2917 = ssub.s32 %s13, 2
        // Predicated region
        $region45: #{tpu_custom_call.1} parent=43 // pred_check
          %p2918 = pneg %p131
        $region46: #{tpu_custom_call.1} parent=43 // pred_check_branch
          %2920 = sbr.rel (%p2918) target = $region48
        $region47: #{tpu_custom_call.1} parent=43 // pred_region
          %s2921 = sand.u32 %s116, 1
          %s2922 = scalar_lea.sflag [#allocation3], %s2921
          %s2923 = sand.u32 %s116, 1
          %s2924 = smul.addr %s2923, 1024
          %s2925 = scalar_lea.vmem [#allocation2], %s2924
          %2926 = dma.done %s2922, 16384
        $region48: #{tpu_custom_call.1} parent=43 // pred_fallthru
          _
      $region44: #{tpu_custom_call.1} parent=5 // pred_fallthru
        _
    $region6: #{tpu_custom_call.1} parent=1 // loop_footer
      %s17 = sadd.s32 1, %s13
    $region7: #{tpu_custom_call.1} parent=1 // loop_footer_branch
      %12 = sbr.rel target = $region3
    $region8: #{tpu_custom_call.1} parent=1 // loop_exit
      _
    %2927 = vsyncpa [#allocation3], 1
    %s2928 = scalar_lea.sflag [#allocation3], 1
    %2929 = vsyncpa %s2928, 1

</llo_original>
